<compile_context>
chip_gen: v7x
topology: tpu7x:2x2x1
jax: 0.10.0
libtpu: 0.0.40
codegen_flags: <defaults>
</compile_context>

<pallas_src>
import jax
import jax.numpy as jnp
from jax import lax
from jax.experimental import pallas as pl
from jax.experimental.pallas import tpu as pltpu


def _nonlocal_kernel(x_ref, w3_ref, bth_ref, bg_ref, ww_ref, bw_ref, p_ref,
                     out_ref):
    """Single grid step over the whole (folded) batch.

    x_ref  : (B, C, N)  channel-major input, row-major spatial positions, f32
    w3_ref : (3*IC, C)  fused theta|phi|g 1x1-conv weights, bf16
    bth_ref: (IC, 1)    theta bias, f32
    bg_ref : (1, IC)    g bias (applied after pooling), f32
    ww_ref : (C, IC)    output 1x1-conv weight with eval-BN scale folded in, bf16
    bw_ref : (C, 1)     output bias (conv bias * bn_scale + bn_shift), f32
    p_ref  : (N, N)     window-major position permutation (one-hot rows), bf16
    out_ref: (B, C, N)
    """
    f32 = jnp.float32
    bf16 = jnp.bfloat16
    B, _, N = x_ref.shape
    IC = ww_ref.shape[1]
    NS = N // 4                                   # sub-sampled length (2x2 pool)

    w3 = w3_ref[...]
    ww = ww_ref[...]
    p = p_ref[...]
    bth = bth_ref[...]
    bg = bg_ref[...]
    bw = bw_ref[...]

    for b in range(B):                            # B=2, unrolled; one grid step
        xb = x_ref[b]                                             # (C, N) f32

        # fused theta|phi|g 1x1 convolutions: one (3IC,C)@(C,N) MXU matmul.
        proj = jnp.dot(w3, xb.astype(bf16),
                       preferred_element_type=f32)                # (3IC, N)
        theta = proj[:IC, :] + bth                                # (IC, N)
        pg = proj[IC:, :]                                         # (2IC, N) phi|g
        # (phi bias dropped: it only adds a per-query constant to the scores
        #  and cancels exactly in the softmax.)

        # One MXU matmul performs the row-major -> window-major position
        # permutation AND the channel-major -> position-major transpose.
        # P rows are one-hot, so the f32 accumulation copies values exactly.
        pg_wm = lax.dot_general(p, pg.astype(bf16),
                                dimension_numbers=(((1,), (1,)), ((), ())),
                                preferred_element_type=f32)       # (N, 2IC)

        # sub_sample MaxPool2d(2): window offset is the leading size-4 axis.
        pooled = jnp.max(pg_wm.reshape(4, NS, 2 * IC), axis=0)    # (Ns, 2IC)
        phi_p = pooled[:, :IC]                                    # (Ns, IC)
        g_p = pooled[:, IC:] + bg                                 # (Ns, IC)

        # attention scores, keys on sublanes / queries on lanes: fT = f^T.
        fT = jnp.dot(phi_p.astype(bf16), theta.astype(bf16),
                     preferred_element_type=f32)                  # (Ns, N)
        # embedded_gaussian: stable softmax over keys, normalization deferred.
        fT = fT - jnp.max(fT, axis=0, keepdims=True)
        e = jnp.exp(fT)                                           # f32
        denom = jnp.sum(e, axis=0, keepdims=True)                 # (1, N)
        yT = jnp.dot(g_p.T.astype(bf16), e.astype(bf16),
                     preferred_element_type=f32)                  # (IC, N)
        yT = yT * pl.reciprocal(denom, approx=True)

        # W(y): 1x1 conv IC->C with eval-mode BatchNorm folded in, + residual.
        wy = jnp.dot(ww, yT.astype(bf16), preferred_element_type=f32)  # (C, N)
        out_ref[b] = (wy + bw + xb).astype(out_ref.dtype)


def nonlocal_block_pallas(x_cm, params):
    """x_cm: (B, C, N) channel-major slabs.  Returns (B, C, N)."""
    B, C, N = x_cm.shape

    def full(arr):
        shp = arr.shape
        return pl.BlockSpec(shp, lambda i: tuple(0 for _ in shp))

    grid_spec = pltpu.PrefetchScalarGridSpec(
        num_scalar_prefetch=0,
        grid=(1,),                                    # batch folded: single step
        in_specs=[
            pl.BlockSpec((B, C, N), lambda i: (0, 0, 0)),        # x
            full(params["w3"]), full(params["b_theta"]), full(params["b_g"]),
            full(params["ww"]), full(params["bw"]), full(params["p"]),
        ],
        out_specs=pl.BlockSpec((B, C, N), lambda i: (0, 0, 0)),
    )
    return pl.pallas_call(
        _nonlocal_kernel,
        out_shape=jax.ShapeDtypeStruct((B, C, N), x_cm.dtype),
        grid_spec=grid_spec,
        compiler_params=pltpu.CompilerParams(
            dimension_semantics=("arbitrary",)),
    )(x_cm, params["w3"], params["b_theta"], params["b_g"],
      params["ww"], params["bw"], params["p"])


def nonlocal_forward(x, params):
    """_NonLocalBlockND.forward (2-D, embedded_gaussian, sub_sample, bn_layer)."""
    B, C, H, W = x.shape
    x_cm = x.reshape(B, C, H * W)             # free, contiguous (no XLA transpose)
    out = nonlocal_block_pallas(x_cm, params)
    return out.reshape(B, C, H, W)            # free, contiguous


def _window_major_perm(H, W, dtype=jnp.bfloat16):
    """One-hot P with P[wm, rm]=1: window-major index -> row-major position."""
    H2, W2 = H // 2, W // 2
    Ns, N = H2 * W2, H * W
    wm = jnp.arange(N)
    off, s = wm // Ns, wm % Ns
    dh, dw = off // 2, off % 2
    i, j = s // W2, s % W2
    rm = (2 * i + dh) * W + (2 * j + dw)
    return jax.nn.one_hot(rm, N, dtype=dtype)          # (N_wm, N_rm)


def nonlocal_ref(x, raw):
    """Pure-JAX NCHW reference mirroring the PyTorch forward (f32, for checks)."""
    B, C, H, W = x.shape
    IC = raw["w_theta"].shape[0]
    conv1x1 = lambda v, w, b: jnp.einsum("bchw,ic->bihw", v, w) + b[None, :, None, None]
    theta = conv1x1(x, raw["w_theta"], raw["b_theta"])
    phi = conv1x1(x, raw["w_phi"], raw["b_phi"])
    g = conv1x1(x, raw["w_g"], raw["b_g"])
    pool = lambda v: v.reshape(B, IC, H // 2, 2, W // 2, 2).max(axis=(3, 5))
    phi, g = pool(phi), pool(g)
    theta_x = theta.reshape(B, IC, -1).transpose(0, 2, 1)      # (B, N, IC)
    phi_x = phi.reshape(B, IC, -1)                              # (B, IC, Ns)
    g_x = g.reshape(B, IC, -1).transpose(0, 2, 1)               # (B, Ns, IC)
    f = jnp.einsum("bni,bim->bnm", theta_x, phi_x)
    att = jax.nn.softmax(f, axis=-1)
    y = jnp.einsum("bnm,bmi->bni", att, g_x)                    # (B, N, IC)
    y = y.transpose(0, 2, 1).reshape(B, IC, H, W)
    wy = jnp.einsum("bihw,ci->bchw", y, raw["w_w"]) + raw["b_w"][None, :, None, None]
    wy = wy * raw["scale"][None, :, None, None] + raw["shift"][None, :, None, None]
    return wy + x


def make_params(key, C, IC, H, W):
    ks = jax.random.split(key, 10)
    f32 = jnp.float32
    bf16 = jnp.bfloat16
    w_theta = 0.05 * jax.random.normal(ks[0], (IC, C), f32)
    b_theta = 0.1 * jax.random.normal(ks[1], (IC,), f32)
    w_phi = 0.05 * jax.random.normal(ks[2], (IC, C), f32)
    b_phi = 0.1 * jax.random.normal(ks[3], (IC,), f32)
    w_g = 0.05 * jax.random.normal(ks[4], (IC, C), f32)
    b_g = 0.1 * jax.random.normal(ks[5], (IC,), f32)
    w_w = 0.1 * jax.random.normal(ks[6], (C, IC), f32)
    b_w = 0.1 * jax.random.normal(ks[7], (C,), f32)
    # NOTE: the PyTorch __init__ sets BN gamma=beta=0, which makes the
    # non-residual branch exactly zero (output == input).  Nonzero values are
    # used here so the kernel path is actually exercised; eval-mode BN
    # semantics (running_mean=0, running_var=1) are otherwise identical.
    gamma = 0.5 + 0.1 * jax.random.normal(ks[8], (C,), f32)
    beta = 0.1 * jax.random.normal(ks[9], (C,), f32)
    running_mean = jnp.zeros((C,), f32)
    running_var = jnp.ones((C,), f32)
    eps = 1e-5
    scale = gamma / jnp.sqrt(running_var + eps)
    shift = beta - running_mean * scale
    raw = dict(w_theta=w_theta, b_theta=b_theta, w_phi=w_phi, b_phi=b_phi,
               w_g=w_g, b_g=b_g, w_w=w_w, b_w=b_w, scale=scale, shift=shift)
    kernel_params = {
        # fused theta|phi|g projection (channel-major): proj = w3 @ x, bf16 MXU
        "w3": jnp.concatenate([w_theta, w_phi, w_g], axis=0).astype(bf16),  # (3IC, C)
        "b_theta": b_theta.reshape(IC, 1),          # f32 (post-accumulation add)
        # phi bias intentionally dropped (cancels in softmax); g bias post-pool
        "b_g": b_g.reshape(1, IC),
        # output 1x1 conv with eval-mode BN folded in
        "ww": (w_w * scale[:, None]).astype(bf16),                          # (C, IC)
        "bw": (b_w * scale + shift).reshape(C, 1),                          # f32
        # constant window-major position permutation (one-hot rows -> exact MXU gather)
        "p": _window_major_perm(H, W, bf16),                                # (N, N)
    }
    return raw, kernel_params


if __name__ == "__main__":
    key = jax.random.PRNGKey(0)
    kx, kp = jax.random.split(key)

    # _NonLocalBlockND(in_channels=64, dimension=2) -> inter_channels = 64 // 2 = 32
    B, C, H, W = 2, 64, 16, 16
    IC = C // 2
    x = jax.random.normal(kx, (B, C, H, W), jnp.float32)
    raw, kparams = make_params(kp, C, IC, H, W)

    z = jax.jit(nonlocal_forward)(x, kparams)
    z = jax.block_until_ready(z)

    z_ref = jax.jit(nonlocal_ref)(x, raw)
    z_ref = jax.block_until_ready(z_ref)

    assert z.shape == x.shape and z.dtype == x.dtype
    # bf16 MXU operands (f32 accumulation) + approx reciprocal vs pure-f32 reference.
    assert jnp.allclose(z, z_ref, rtol=3e-2, atol=3e-2), "mismatch vs JAX reference"
    print("KERNEL_OK")
</pallas_src>

<mosaic_0001>
module attributes {stable_mosaic.version = 11 : i64} {
  func.func @_nonlocal_kernel(%arg0: i32, %arg1: memref<2x64x256xf32, #tpu.memory_space<vmem>>, %arg2: memref<96x64xbf16, #tpu.memory_space<vmem>>, %arg3: memref<32x1xf32, #tpu.memory_space<vmem>>, %arg4: memref<1x32xf32, #tpu.memory_space<vmem>>, %arg5: memref<64x32xbf16, #tpu.memory_space<vmem>>, %arg6: memref<64x1xf32, #tpu.memory_space<vmem>>, %arg7: memref<256x256xbf16, #tpu.memory_space<vmem>>, %arg8: memref<2x64x256xf32, #tpu.memory_space<vmem>>) attributes {dimension_semantics = [#tpu.dimension_semantics<arbitrary>], iteration_bounds = array<i64: 1>, scalar_prefetch = 0 : i64, scratch_operands = 0 : i64, tpu.core_type = #tpu.core_type<tc>, window_params = [{pipeline_mode = #tpu.pipeline_mode<synchronous>, transform_indices = @transform_0, window_bounds = array<i64: 2, 64, 256>}, {pipeline_mode = #tpu.pipeline_mode<synchronous>, transform_indices = @transform_1, window_bounds = array<i64: 96, 64>}, {pipeline_mode = #tpu.pipeline_mode<synchronous>, transform_indices = @transform_2, window_bounds = array<i64: 32, 1>}, {pipeline_mode = #tpu.pipeline_mode<synchronous>, transform_indices = @transform_3, window_bounds = array<i64: 1, 32>}, {pipeline_mode = #tpu.pipeline_mode<synchronous>, transform_indices = @transform_4, window_bounds = array<i64: 64, 32>}, {pipeline_mode = #tpu.pipeline_mode<synchronous>, transform_indices = @transform_5, window_bounds = array<i64: 64, 1>}, {pipeline_mode = #tpu.pipeline_mode<synchronous>, transform_indices = @transform_6, window_bounds = array<i64: 256, 256>}, {pipeline_mode = #tpu.pipeline_mode<synchronous>, transform_indices = @transform_7, window_bounds = array<i64: 2, 64, 256>}]} {
    %c0 = arith.constant 0 : index
    %c0_0 = arith.constant 0 : index
    %0 = vector.load %arg2[%c0, %c0_0] : memref<96x64xbf16, #tpu.memory_space<vmem>>, vector<96x64xbf16>
    %c0_1 = arith.constant 0 : index
    %c0_2 = arith.constant 0 : index
    %1 = vector.load %arg5[%c0_1, %c0_2] : memref<64x32xbf16, #tpu.memory_space<vmem>>, vector<64x32xbf16>
    %c0_3 = arith.constant 0 : index
    %c0_4 = arith.constant 0 : index
    %2 = vector.load %arg7[%c0_3, %c0_4] : memref<256x256xbf16, #tpu.memory_space<vmem>>, vector<256x256xbf16>
    %c0_5 = arith.constant 0 : index
    %c0_6 = arith.constant 0 : index
    %3 = vector.load %arg3[%c0_5, %c0_6] : memref<32x1xf32, #tpu.memory_space<vmem>>, vector<32x1xf32>
    %c0_7 = arith.constant 0 : index
    %c0_8 = arith.constant 0 : index
    %4 = vector.load %arg4[%c0_7, %c0_8] : memref<1x32xf32, #tpu.memory_space<vmem>>, vector<1x32xf32>
    %c0_9 = arith.constant 0 : index
    %c0_10 = arith.constant 0 : index
    %5 = vector.load %arg6[%c0_9, %c0_10] : memref<64x1xf32, #tpu.memory_space<vmem>>, vector<64x1xf32>
    %c0_11 = arith.constant 0 : index
    %c0_12 = arith.constant 0 : index
    %c0_13 = arith.constant 0 : index
    %6 = vector.load %arg1[%c0_11, %c0_12, %c0_13] : memref<2x64x256xf32, #tpu.memory_space<vmem>>, vector<1x64x256xf32>
    %7 = vector.shape_cast %6 : vector<1x64x256xf32> to vector<64x256xf32>
    %8 = arith.truncf %7 : vector<64x256xf32> to vector<64x256xbf16>
    %cst = arith.constant dense<0.000000e+00> : vector<96x256xf32>
    %9 = tpu.matmul %0, %8, %cst {dimension_numbers = #tpu.dot_dimension_numbers<[1], [0], [0], [1], [0, 0, 1, 1], [], []>} : vector<96x64xbf16>, vector<64x256xbf16>, vector<96x256xf32> -> vector<96x256xf32>
    %10 = vector.extract_strided_slice %9 {offsets = [0, 0], sizes = [32, 256], strides = [1, 1]} : vector<96x256xf32> to vector<32x256xf32>
    %11 = vector.broadcast %3 : vector<32x1xf32> to vector<32x256xf32>
    %12 = arith.addf %10, %11 : vector<32x256xf32>
    %13 = vector.extract_strided_slice %9 {offsets = [32, 0], sizes = [64, 256], strides = [1, 1]} : vector<96x256xf32> to vector<64x256xf32>
    %14 = arith.truncf %13 : vector<64x256xf32> to vector<64x256xbf16>
    %cst_14 = arith.constant dense<0.000000e+00> : vector<256x64xf32>
    %15 = tpu.matmul %2, %14, %cst_14 {dimension_numbers = #tpu.dot_dimension_numbers<[1], [1], [0], [0], [0, 0, 1, 0], [], []>} : vector<256x256xbf16>, vector<64x256xbf16>, vector<256x64xf32> -> vector<256x64xf32>
    %16 = vector.shape_cast %15 : vector<256x64xf32> to vector<4x64x64xf32>
    %cst_15 = arith.constant dense<0xFF800000> : vector<64x64xf32>
    %17 = vector.multi_reduction <maximumf>, %16, %cst_15 [0] : vector<4x64x64xf32> to vector<64x64xf32>
    %18 = vector.extract_strided_slice %17 {offsets = [0, 0], sizes = [64, 32], strides = [1, 1]} : vector<64x64xf32> to vector<64x32xf32>
    %19 = vector.extract_strided_slice %17 {offsets = [0, 32], sizes = [64, 32], strides = [1, 1]} : vector<64x64xf32> to vector<64x32xf32>
    %20 = vector.broadcast %4 : vector<1x32xf32> to vector<64x32xf32>
    %21 = arith.addf %19, %20 : vector<64x32xf32>
    %22 = arith.truncf %18 : vector<64x32xf32> to vector<64x32xbf16>
    %23 = arith.truncf %12 : vector<32x256xf32> to vector<32x256xbf16>
    %cst_16 = arith.constant dense<0.000000e+00> : vector<64x256xf32>
    %24 = tpu.matmul %22, %23, %cst_16 {dimension_numbers = #tpu.dot_dimension_numbers<[1], [0], [0], [1], [0, 0, 1, 1], [], []>} : vector<64x32xbf16>, vector<32x256xbf16>, vector<64x256xf32> -> vector<64x256xf32>
    %cst_17 = arith.constant dense<0xFF800000> : vector<256xf32>
    %25 = vector.multi_reduction <maximumf>, %24, %cst_17 [0] : vector<64x256xf32> to vector<256xf32>
    %26 = vector.shape_cast %25 : vector<256xf32> to vector<1x256xf32>
    %27 = vector.broadcast %26 : vector<1x256xf32> to vector<64x256xf32>
    %28 = arith.subf %24, %27 : vector<64x256xf32>
    %29 = math.exp %28 : vector<64x256xf32>
    %cst_18 = arith.constant dense<0.000000e+00> : vector<256xf32>
    %30 = vector.multi_reduction <add>, %29, %cst_18 [0] : vector<64x256xf32> to vector<256xf32>
    %31 = vector.shape_cast %30 : vector<256xf32> to vector<1x256xf32>
    %32 = tpu.transpose %21, [1, 0] : vector<64x32xf32> -> vector<32x64xf32>
    %33 = arith.truncf %32 : vector<32x64xf32> to vector<32x64xbf16>
    %34 = arith.truncf %29 : vector<64x256xf32> to vector<64x256xbf16>
    %cst_19 = arith.constant dense<0.000000e+00> : vector<32x256xf32>
    %35 = tpu.matmul %33, %34, %cst_19 {dimension_numbers = #tpu.dot_dimension_numbers<[1], [0], [0], [1], [0, 0, 1, 1], [], []>} : vector<32x64xbf16>, vector<64x256xbf16>, vector<32x256xf32> -> vector<32x256xf32>
    %36 = tpu.reciprocal %31 {approx = true} : vector<1x256xf32> -> vector<1x256xf32>
    %37 = vector.broadcast %36 : vector<1x256xf32> to vector<32x256xf32>
    %38 = arith.mulf %35, %37 : vector<32x256xf32>
    %39 = arith.truncf %38 : vector<32x256xf32> to vector<32x256xbf16>
    %cst_20 = arith.constant dense<0.000000e+00> : vector<64x256xf32>
    %40 = tpu.matmul %1, %39, %cst_20 {dimension_numbers = #tpu.dot_dimension_numbers<[1], [0], [0], [1], [0, 0, 1, 1], [], []>} : vector<64x32xbf16>, vector<32x256xbf16>, vector<64x256xf32> -> vector<64x256xf32>
    %41 = vector.broadcast %5 : vector<64x1xf32> to vector<64x256xf32>
    %42 = arith.addf %40, %41 : vector<64x256xf32>
    %43 = arith.addf %42, %7 : vector<64x256xf32>
    %c0_21 = arith.constant 0 : index
    %c0_22 = arith.constant 0 : index
    %c0_23 = arith.constant 0 : index
    %44 = vector.load %arg8[%c0_21, %c0_22, %c0_23] : memref<2x64x256xf32, #tpu.memory_space<vmem>>, vector<1x64x256xf32>
    %45 = vector.shape_cast %44 : vector<1x64x256xf32> to vector<64x256xf32>
    %46 = vector.shape_cast %43 : vector<64x256xf32> to vector<1x64x256xf32>
    tpu.vector_store %arg8[%c0_21, %c0_22, %c0_23], %46 {strides = array<i32>} : memref<2x64x256xf32, #tpu.memory_space<vmem>>, vector<1x64x256xf32>,
    %c1 = arith.constant 1 : index
    %c0_24 = arith.constant 0 : index
    %c0_25 = arith.constant 0 : index
    %47 = vector.load %arg1[%c1, %c0_24, %c0_25] : memref<2x64x256xf32, #tpu.memory_space<vmem>>, vector<1x64x256xf32>
    %48 = vector.shape_cast %47 : vector<1x64x256xf32> to vector<64x256xf32>
    %49 = arith.truncf %48 : vector<64x256xf32> to vector<64x256xbf16>
    %cst_26 = arith.constant dense<0.000000e+00> : vector<96x256xf32>
    %50 = tpu.matmul %0, %49, %cst_26 {dimension_numbers = #tpu.dot_dimension_numbers<[1], [0], [0], [1], [0, 0, 1, 1], [], []>} : vector<96x64xbf16>, vector<64x256xbf16>, vector<96x256xf32> -> vector<96x256xf32>
    %51 = vector.extract_strided_slice %50 {offsets = [0, 0], sizes = [32, 256], strides = [1, 1]} : vector<96x256xf32> to vector<32x256xf32>
    %52 = vector.broadcast %3 : vector<32x1xf32> to vector<32x256xf32>
    %53 = arith.addf %51, %52 : vector<32x256xf32>
    %54 = vector.extract_strided_slice %50 {offsets = [32, 0], sizes = [64, 256], strides = [1, 1]} : vector<96x256xf32> to vector<64x256xf32>
    %55 = arith.truncf %54 : vector<64x256xf32> to vector<64x256xbf16>
    %cst_27 = arith.constant dense<0.000000e+00> : vector<256x64xf32>
    %56 = tpu.matmul %2, %55, %cst_27 {dimension_numbers = #tpu.dot_dimension_numbers<[1], [1], [0], [0], [0, 0, 1, 0], [], []>} : vector<256x256xbf16>, vector<64x256xbf16>, vector<256x64xf32> -> vector<256x64xf32>
    %57 = vector.shape_cast %56 : vector<256x64xf32> to vector<4x64x64xf32>
    %cst_28 = arith.constant dense<0xFF800000> : vector<64x64xf32>
    %58 = vector.multi_reduction <maximumf>, %57, %cst_28 [0] : vector<4x64x64xf32> to vector<64x64xf32>
    %59 = vector.extract_strided_slice %58 {offsets = [0, 0], sizes = [64, 32], strides = [1, 1]} : vector<64x64xf32> to vector<64x32xf32>
    %60 = vector.extract_strided_slice %58 {offsets = [0, 32], sizes = [64, 32], strides = [1, 1]} : vector<64x64xf32> to vector<64x32xf32>
    %61 = vector.broadcast %4 : vector<1x32xf32> to vector<64x32xf32>
    %62 = arith.addf %60, %61 : vector<64x32xf32>
    %63 = arith.truncf %59 : vector<64x32xf32> to vector<64x32xbf16>
    %64 = arith.truncf %53 : vector<32x256xf32> to vector<32x256xbf16>
    %cst_29 = arith.constant dense<0.000000e+00> : vector<64x256xf32>
    %65 = tpu.matmul %63, %64, %cst_29 {dimension_numbers = #tpu.dot_dimension_numbers<[1], [0], [0], [1], [0, 0, 1, 1], [], []>} : vector<64x32xbf16>, vector<32x256xbf16>, vector<64x256xf32> -> vector<64x256xf32>
    %cst_30 = arith.constant dense<0xFF800000> : vector<256xf32>
    %66 = vector.multi_reduction <maximumf>, %65, %cst_30 [0] : vector<64x256xf32> to vector<256xf32>
    %67 = vector.shape_cast %66 : vector<256xf32> to vector<1x256xf32>
    %68 = vector.broadcast %67 : vector<1x256xf32> to vector<64x256xf32>
    %69 = arith.subf %65, %68 : vector<64x256xf32>
    %70 = math.exp %69 : vector<64x256xf32>
    %cst_31 = arith.constant dense<0.000000e+00> : vector<256xf32>
    %71 = vector.multi_reduction <add>, %70, %cst_31 [0] : vector<64x256xf32> to vector<256xf32>
    %72 = vector.shape_cast %71 : vector<256xf32> to vector<1x256xf32>
    %73 = tpu.transpose %62, [1, 0] : vector<64x32xf32> -> vector<32x64xf32>
    %74 = arith.truncf %73 : vector<32x64xf32> to vector<32x64xbf16>
    %75 = arith.truncf %70 : vector<64x256xf32> to vector<64x256xbf16>
    %cst_32 = arith.constant dense<0.000000e+00> : vector<32x256xf32>
    %76 = tpu.matmul %74, %75, %cst_32 {dimension_numbers = #tpu.dot_dimension_numbers<[1], [0], [0], [1], [0, 0, 1, 1], [], []>} : vector<32x64xbf16>, vector<64x256xbf16>, vector<32x256xf32> -> vector<32x256xf32>
    %77 = tpu.reciprocal %72 {approx = true} : vector<1x256xf32> -> vector<1x256xf32>
    %78 = vector.broadcast %77 : vector<1x256xf32> to vector<32x256xf32>
    %79 = arith.mulf %76, %78 : vector<32x256xf32>
    %80 = arith.truncf %79 : vector<32x256xf32> to vector<32x256xbf16>
    %cst_33 = arith.constant dense<0.000000e+00> : vector<64x256xf32>
    %81 = tpu.matmul %1, %80, %cst_33 {dimension_numbers = #tpu.dot_dimension_numbers<[1], [0], [0], [1], [0, 0, 1, 1], [], []>} : vector<64x32xbf16>, vector<32x256xbf16>, vector<64x256xf32> -> vector<64x256xf32>
    %82 = vector.broadcast %5 : vector<64x1xf32> to vector<64x256xf32>
    %83 = arith.addf %81, %82 : vector<64x256xf32>
    %84 = arith.addf %83, %48 : vector<64x256xf32>
    %c1_34 = arith.constant 1 : index
    %c0_35 = arith.constant 0 : index
    %c0_36 = arith.constant 0 : index
    %85 = vector.load %arg8[%c1_34, %c0_35, %c0_36] : memref<2x64x256xf32, #tpu.memory_space<vmem>>, vector<1x64x256xf32>
    %86 = vector.shape_cast %85 : vector<1x64x256xf32> to vector<64x256xf32>
    %87 = vector.shape_cast %84 : vector<64x256xf32> to vector<1x64x256xf32>
    tpu.vector_store %arg8[%c1_34, %c0_35, %c0_36], %87 {strides = array<i32>} : memref<2x64x256xf32, #tpu.memory_space<vmem>>, vector<1x64x256xf32>,
    return
  }
  func.func @transform_0(%arg0: i32) -> (i32, i32, i32) {
    %c0_i32 = arith.constant 0 : i32
    %c0_i32_0 = arith.constant 0 : i32
    %c0_i32_1 = arith.constant 0 : i32
    %c0_i32_2 = arith.constant 0 : i32
    return %c0_i32, %c0_i32_0, %c0_i32_1 : i32, i32, i32
  }
  func.func @transform_1(%arg0: i32) -> (i32, i32) {
    %c0_i32 = arith.constant 0 : i32
    %c0_i32_0 = arith.constant 0 : i32
    %c0_i32_1 = arith.constant 0 : i32
    return %c0_i32, %c0_i32_0 : i32, i32
  }
  func.func @transform_2(%arg0: i32) -> (i32, i32) {
    %c0_i32 = arith.constant 0 : i32
    %c0_i32_0 = arith.constant 0 : i32
    %c0_i32_1 = arith.constant 0 : i32
    return %c0_i32, %c0_i32_0 : i32, i32
  }
  func.func @transform_3(%arg0: i32) -> (i32, i32) {
    %c0_i32 = arith.constant 0 : i32
    %c0_i32_0 = arith.constant 0 : i32
    %c0_i32_1 = arith.constant 0 : i32
    return %c0_i32, %c0_i32_0 : i32, i32
  }
  func.func @transform_4(%arg0: i32) -> (i32, i32) {
    %c0_i32 = arith.constant 0 : i32
    %c0_i32_0 = arith.constant 0 : i32
    %c0_i32_1 = arith.constant 0 : i32
    return %c0_i32, %c0_i32_0 : i32, i32
  }
  func.func @transform_5(%arg0: i32) -> (i32, i32) {
    %c0_i32 = arith.constant 0 : i32
    %c0_i32_0 = arith.constant 0 : i32
    %c0_i32_1 = arith.constant 0 : i32
    return %c0_i32, %c0_i32_0 : i32, i32
  }
  func.func @transform_6(%arg0: i32) -> (i32, i32) {
    %c0_i32 = arith.constant 0 : i32
    %c0_i32_0 = arith.constant 0 : i32
    %c0_i32_1 = arith.constant 0 : i32
    return %c0_i32, %c0_i32_0 : i32, i32
  }
  func.func @transform_7(%arg0: i32) -> (i32, i32, i32) {
    %c0_i32 = arith.constant 0 : i32
    %c0_i32_0 = arith.constant 0 : i32
    %c0_i32_1 = arith.constant 0 : i32
    %c0_i32_2 = arith.constant 0 : i32
    return %c0_i32, %c0_i32_0, %c0_i32_1 : i32, i32, i32
  }
}

</mosaic_0001>

<llo_original>
// kernel: nonlocal_forward.1
$region0: #{nonlocal_forward.1}
  #allocation0 [shape = 'u32[]', space=smem, size = 0x4, offset = 0x4, fixed_abs, tag = 'smem constant byte address 0x4 - core index']
  #allocation1 [shape = 'u32[144,128]{1,0:T(1,128)}', space=vmem, size = 0x12000, scoped, tag = 'internal scratch']
  %s0 = inlined_call_operand.vmem [shape: f32[2,64,256], index: 0, kind: input, shape index: {}]
  %s1 = inlined_call_operand.vmem [shape: bf16[96,64], index: 1, kind: input, shape index: {}]
  %s2 = inlined_call_operand.vmem [shape: f32[32,1], index: 2, kind: input, shape index: {}]
  %s3 = inlined_call_operand.vmem [shape: f32[1,32], index: 3, kind: input, shape index: {}]
  %s4 = inlined_call_operand.vmem [shape: bf16[64,32], index: 4, kind: input, shape index: {}]
  %s5 = inlined_call_operand.vmem [shape: f32[64,1], index: 5, kind: input, shape index: {}]
  %s6 = inlined_call_operand.vmem [shape: bf16[256,256], index: 6, kind: input, shape index: {}]
  %s7 = inlined_call_operand.vmem [shape: f32[2,64,256], index: 7, kind: output, shape index: {}]
  %s8 = sld [smem:[#allocation0]]
  $region38: #{nonlocal_forward.1} parent=0
    _
  %s10 = ssub.s32 1, %s8
  %s11 = scalar_select 0, %s10, %s8
  // Predicated region
  $region2: #{nonlocal_forward.1} parent=0 // pred_check
    _
  $region3: #{nonlocal_forward.1} parent=0 // pred_check_branch
    %13 = sbr.rel (0) target = $region5
  $region4: #{nonlocal_forward.1} parent=0 // pred_region
    _
  $region5: #{nonlocal_forward.1} parent=0 // pred_fallthru
    _
  // Predicated region
  $region6: #{nonlocal_forward.1} parent=0 // pred_check
    _
  $region7: #{nonlocal_forward.1} parent=0 // pred_check_branch
    %15 = sbr.rel (0) target = $region9
  $region8: #{nonlocal_forward.1} parent=0 // pred_region
    _
  $region9: #{nonlocal_forward.1} parent=0 // pred_fallthru
    _
  // Predicated region
  $region10: #{nonlocal_forward.1} parent=0 // pred_check
    _
  $region11: #{nonlocal_forward.1} parent=0 // pred_check_branch
    %17 = sbr.rel (0) target = $region13
  $region12: #{nonlocal_forward.1} parent=0 // pred_region
    _
  $region13: #{nonlocal_forward.1} parent=0 // pred_fallthru
    _
  // Predicated region
  $region14: #{nonlocal_forward.1} parent=0 // pred_check
    _
  $region15: #{nonlocal_forward.1} parent=0 // pred_check_branch
    %19 = sbr.rel (0) target = $region17
  $region16: #{nonlocal_forward.1} parent=0 // pred_region
    _
  $region17: #{nonlocal_forward.1} parent=0 // pred_fallthru
    _
  // Predicated region
  $region18: #{nonlocal_forward.1} parent=0 // pred_check
    _
  $region19: #{nonlocal_forward.1} parent=0 // pred_check_branch
    %21 = sbr.rel (0) target = $region21
  $region20: #{nonlocal_forward.1} parent=0 // pred_region
    _
  $region21: #{nonlocal_forward.1} parent=0 // pred_fallthru
    _
  // Predicated region
  $region22: #{nonlocal_forward.1} parent=0 // pred_check
    _
  $region23: #{nonlocal_forward.1} parent=0 // pred_check_branch
    %23 = sbr.rel (0) target = $region25
  $region24: #{nonlocal_forward.1} parent=0 // pred_region
    _
  $region25: #{nonlocal_forward.1} parent=0 // pred_fallthru
    _
  // Predicated region
  $region26: #{nonlocal_forward.1} parent=0 // pred_check
    _
  $region27: #{nonlocal_forward.1} parent=0 // pred_check_branch
    %25 = sbr.rel (0) target = $region29
  $region28: #{nonlocal_forward.1} parent=0 // pred_region
    _
  $region29: #{nonlocal_forward.1} parent=0 // pred_fallthru
    _
  %v27 = vld [vmem:[%s1] sm:$0xf]
  %v28 = vld [vmem:[%s1 + $0x4] sm:$0xf]
  %v29 = vld [vmem:[%s1 + $0x8] sm:$0xf]
  %v30 = vld [vmem:[%s1 + $0xc] sm:$0xf]
  %v31 = vld [vmem:[%s1 + $0x10] sm:$0xf]
  %v32 = vld [vmem:[%s1 + $0x14] sm:$0xf]
  %v33 = vld [vmem:[%s1 + $0x18] sm:$0xf]
  %v34 = vld [vmem:[%s1 + $0x1c] sm:$0xf]
  %v35 = vld [vmem:[%s1 + $0x20] sm:$0xf]
  %v36 = vld [vmem:[%s1 + $0x24] sm:$0xf]
  %v37 = vld [vmem:[%s1 + $0x28] sm:$0xf]
  %v38 = vld [vmem:[%s1 + $0x2c] sm:$0xf]
  %v39 = vld [vmem:[%s4] sm:$0xf]
  %v40 = vld [vmem:[%s4 + $0x4] sm:$0xf]
  %v41 = vld [vmem:[%s4 + $0x8] sm:$0xf]
  %v42 = vld [vmem:[%s4 + $0xc] sm:$0xf]
  %v43 = vld [vmem:[%s4 + $0x10] sm:$0xf]
  %v44 = vld [vmem:[%s4 + $0x14] sm:$0xf]
  %v45 = vld [vmem:[%s4 + $0x18] sm:$0xf]
  %v46 = vld [vmem:[%s4 + $0x1c] sm:$0xf]
  %v47 = vld [vmem:[%s6] sm:$0xff]
  %v48 = vld [vmem:[%s6 + $0x8] sm:$0xff]
  %v49 = vld [vmem:[%s6 + $0x10] sm:$0xff]
  %v50 = vld [vmem:[%s6 + $0x18] sm:$0xff]
  %v51 = vld [vmem:[%s6 + $0x20] sm:$0xff]
  %v52 = vld [vmem:[%s6 + $0x28] sm:$0xff]
  %v53 = vld [vmem:[%s6 + $0x30] sm:$0xff]
  %v54 = vld [vmem:[%s6 + $0x38] sm:$0xff]
  %v55 = vld [vmem:[%s6 + $0x40] sm:$0xff]
  %v56 = vld [vmem:[%s6 + $0x48] sm:$0xff]
  %v57 = vld [vmem:[%s6 + $0x50] sm:$0xff]
  %v58 = vld [vmem:[%s6 + $0x58] sm:$0xff]
  %v59 = vld [vmem:[%s6 + $0x60] sm:$0xff]
  %v60 = vld [vmem:[%s6 + $0x68] sm:$0xff]
  %v61 = vld [vmem:[%s6 + $0x70] sm:$0xff]
  %v62 = vld [vmem:[%s6 + $0x78] sm:$0xff]
  %v63 = vld [vmem:[%s6 + $0x80] sm:$0xff]
  %v64 = vld [vmem:[%s6 + $0x88] sm:$0xff]
  %v65 = vld [vmem:[%s6 + $0x90] sm:$0xff]
  %v66 = vld [vmem:[%s6 + $0x98] sm:$0xff]
  %v67 = vld [vmem:[%s6 + $0xa0] sm:$0xff]
  %v68 = vld [vmem:[%s6 + $0xa8] sm:$0xff]
  %v69 = vld [vmem:[%s6 + $0xb0] sm:$0xff]
  %v70 = vld [vmem:[%s6 + $0xb8] sm:$0xff]
  %v71 = vld [vmem:[%s6 + $0xc0] sm:$0xff]
  %v72 = vld [vmem:[%s6 + $0xc8] sm:$0xff]
  %v73 = vld [vmem:[%s6 + $0xd0] sm:$0xff]
  %v74 = vld [vmem:[%s6 + $0xd8] sm:$0xff]
  %v75 = vld [vmem:[%s6 + $0xe0] sm:$0xff]
  %v76 = vld [vmem:[%s6 + $0xe8] sm:$0xff]
  %v77 = vld [vmem:[%s6 + $0xf0] sm:$0xff]
  %v78 = vld [vmem:[%s6 + $0xf8] sm:$0xff]
  %v79 = vld [vmem:[%s2] sm:$0xff]
  %v80 = vld [vmem:[%s2 + $0x8] sm:$0xff]
  %v81 = vld [vmem:[%s2 + $0x10] sm:$0xff]
  %v82 = vld [vmem:[%s2 + $0x18] sm:$0xff]
  %v83 = vld [vmem:[%s3] sm:$0x1]
  %v84 = vld [vmem:[%s5] sm:$0xff]
  %v85 = vld [vmem:[%s5 + $0x8] sm:$0xff]
  %v86 = vld [vmem:[%s5 + $0x10] sm:$0xff]
  %v87 = vld [vmem:[%s5 + $0x18] sm:$0xff]
  %v88 = vld [vmem:[%s5 + $0x20] sm:$0xff]
  %v89 = vld [vmem:[%s5 + $0x28] sm:$0xff]
  %v90 = vld [vmem:[%s5 + $0x30] sm:$0xff]
  %v91 = vld [vmem:[%s5 + $0x38] sm:$0xff]
  %v92 = vld [vmem:[%s0] sm:$0xff]
  %v93 = vld [vmem:[%s0 + $0x8] sm:$0xff]
  %v94 = vld [vmem:[%s0 + $0x10] sm:$0xff]
  %v95 = vld [vmem:[%s0 + $0x18] sm:$0xff]
  %v96 = vld [vmem:[%s0 + $0x20] sm:$0xff]
  %v97 = vld [vmem:[%s0 + $0x28] sm:$0xff]
  %v98 = vld [vmem:[%s0 + $0x30] sm:$0xff]
  %v99 = vld [vmem:[%s0 + $0x38] sm:$0xff]
  %v100 = vld [vmem:[%s0 + $0x40] sm:$0xff]
  %v101 = vld [vmem:[%s0 + $0x48] sm:$0xff]
  %v102 = vld [vmem:[%s0 + $0x50] sm:$0xff]
  %v103 = vld [vmem:[%s0 + $0x58] sm:$0xff]
  %v104 = vld [vmem:[%s0 + $0x60] sm:$0xff]
  %v105 = vld [vmem:[%s0 + $0x68] sm:$0xff]
  %v106 = vld [vmem:[%s0 + $0x70] sm:$0xff]
  %v107 = vld [vmem:[%s0 + $0x78] sm:$0xff]
  %v108 = vpack.c.bf16 %v94, %v92
  %v109 = vpack.c.bf16 %v95, %v93
  %v110 = vpack.c.bf16 %v98, %v96
  %v111 = vpack.c.bf16 %v99, %v97
  %v112 = vpack.c.bf16 %v102, %v100
  %v113 = vpack.c.bf16 %v103, %v101
  %v114 = vpack.c.bf16 %v106, %v104
  %v115 = vpack.c.bf16 %v107, %v105
  %v128 = vunpack.c.l.b16 %v27
  %v129 = vunpack.c.l.b16 %v28
  %v130 = vunpack.c.l.b16 %v29
  %v131 = vunpack.c.l.b16 %v30
  %v132 = vunpack.c.l.b16 %v31
  %v133 = vunpack.c.l.b16 %v32
  %v134 = vunpack.c.l.b16 %v33
  %v135 = vunpack.c.l.b16 %v34
  %v136 = vunpack.c.l.b16 %v35
  %v137 = vunpack.c.l.b16 %v36
  %v138 = vunpack.c.l.b16 %v37
  %v139 = vunpack.c.l.b16 %v38
  %v140 = vpack.c.b16 %v129, %v128
  %v141 = vpack.c.b16 %v131, %v130
  %v142 = vpack.c.b16 %v133, %v132
  %v143 = vpack.c.b16 %v135, %v134
  %v144 = vpack.c.b16 %v137, %v136
  %v145 = vpack.c.b16 %v139, %v138
  %vm146 = vcmask 523264
  %v148 = vsel %vm146, %v140, 0
  %v151 = vsel %vm146, %v141, 0
  %v154 = vsel %vm146, %v142, 0
  %v157 = vsel %vm146, %v143, 0
  %v160 = vsel %vm146, %v144, 0
  %v163 = vsel %vm146, %v145, 0
  %165 = vmatprep.subr.bf16.mxu0 %v109
  %166 = vmatpush1.bf16.msra.mxu0 %v108
  %167 = vmatprep.subr.bf16.mxu0 %v111
  %168 = vmatpush1.bf16.msra.mxu0 %v110
  %169 = vmatprep.subr.bf16.mxu0 %v113
  %170 = vmatpush1.bf16.msra.mxu0 %v112
  %171 = vmatprep.subr.bf16.mxu0 %v115
  %172 = vmatpush1.bf16.msra.mxu0 %v114
  %173 = vmatprep.subr.bf16.mxu0 0
  %174 = vmatpush1.bf16.msra.mxu0 0
  %175 = vmatprep.subr.bf16.mxu0 0
  %176 = vmatpush1.bf16.msra.mxu0 0
  %177 = vmatprep.subr.bf16.mxu0 0
  %178 = vmatpush1.bf16.msra.mxu0 0
  %179 = vmatprep.subr.bf16.mxu0 0
  %180 = vmatpush1.bf16.msra.mxu0 0
  %181 = vmatprep.subr.bf16.mxu0 0
  %182 = vmatpush1.bf16.msra.mxu0 0
  %183 = vmatprep.subr.bf16.mxu0 0
  %184 = vmatpush1.bf16.msra.mxu0 0
  %185 = vmatprep.subr.bf16.mxu0 0
  %186 = vmatpush1.bf16.msra.mxu0 0
  %187 = vmatprep.subr.bf16.mxu0 0
  %188 = vmatpush1.bf16.msra.mxu0 0
  %189 = vmatprep.subr.bf16.mxu0 0
  %190 = vmatpush1.bf16.msra.mxu0 0
  %191 = vmatprep.subr.bf16.mxu0 0
  %192 = vmatpush1.bf16.msra.mxu0 0
  %193 = vmatprep.subr.bf16.mxu0 0
  %194 = vmatpush1.bf16.msra.mxu0 0
  %195 = vmatprep.subr.bf16.mxu0 0
  %196 = vmatpush1.bf16.msra.mxu0 0
  %197 = vmatprep.mubr.bf16.mxu0 0
  %198 = vmatmul.mubr.bf16.gmra.mrb[0].mxu0 %v148
  %v199 = vpop.f32.mrb[0].mxu0
  %v200 = vadd.f32 0.0, %v199
  %v201 = vpop.f32.mrb[0].mxu0
  %v202 = vadd.f32 0.0, %v201
  %v203 = vpop.f32.mrb[0].mxu0
  %v204 = vadd.f32 0.0, %v203
  %v205 = vpop.f32.mrb[0].mxu0
  %v206 = vadd.f32 0.0, %v205
  %207 = vmatprep.mubr.bf16.mxu0 0
  %208 = vmatmul.mubr.bf16.gmra.mrb[0].mxu0 %v151
  %v209 = vpop.f32.mrb[0].mxu0
  %v210 = vadd.f32 0.0, %v209
  %v211 = vpop.f32.mrb[0].mxu0
  %v212 = vadd.f32 0.0, %v211
  %v213 = vpop.f32.mrb[0].mxu0
  %v214 = vadd.f32 0.0, %v213
  %v215 = vpop.f32.mrb[0].mxu0
  %v216 = vadd.f32 0.0, %v215
  %217 = vmatprep.mubr.bf16.mxu0 0
  %218 = vmatmul.mubr.bf16.gmra.mrb[0].mxu0 %v154
  %v219 = vpop.f32.mrb[0].mxu0
  %v220 = vadd.f32 0.0, %v219
  %v221 = vpop.f32.mrb[0].mxu0
  %v222 = vadd.f32 0.0, %v221
  %v223 = vpop.f32.mrb[0].mxu0
  %v224 = vadd.f32 0.0, %v223
  %v225 = vpop.f32.mrb[0].mxu0
  %v226 = vadd.f32 0.0, %v225
  %227 = vmatprep.mubr.bf16.mxu0 0
  %228 = vmatmul.mubr.bf16.gmra.mrb[0].mxu0 %v157
  %v229 = vpop.f32.mrb[0].mxu0
  %v230 = vadd.f32 0.0, %v229
  %v231 = vpop.f32.mrb[0].mxu0
  %v232 = vadd.f32 0.0, %v231
  %v233 = vpop.f32.mrb[0].mxu0
  %v234 = vadd.f32 0.0, %v233
  %v235 = vpop.f32.mrb[0].mxu0
  %v236 = vadd.f32 0.0, %v235
  %237 = vmatprep.mubr.bf16.mxu0 0
  %238 = vmatmul.mubr.bf16.gmra.mrb[0].mxu0 %v160
  %v239 = vpop.f32.mrb[0].mxu0
  %v240 = vadd.f32 0.0, %v239
  %v241 = vpop.f32.mrb[0].mxu0
  %v242 = vadd.f32 0.0, %v241
  %v243 = vpop.f32.mrb[0].mxu0
  %v244 = vadd.f32 0.0, %v243
  %v245 = vpop.f32.mrb[0].mxu0
  %v246 = vadd.f32 0.0, %v245
  %247 = vmatprep.mubr.bf16.mxu0 0
  %248 = vmatmul.mubr.bf16.gmra.mrb[0].mxu0 %v163
  %v249 = vpop.f32.mrb[0].mxu0
  %v250 = vadd.f32 0.0, %v249
  %v251 = vpop.f32.mrb[0].mxu0
  %v252 = vadd.f32 0.0, %v251
  %v253 = vpop.f32.mrb[0].mxu0
  %v254 = vadd.f32 0.0, %v253
  %v255 = vpop.f32.mrb[0].mxu0
  %v256 = vadd.f32 0.0, %v255
  %257 = vdwg.mxu0
  %259 = vset.pattern.permute.xlu0 0
  %260 = vperm.xlu0 %259, %v79
  %v261 = vpop.permute.xlu0 %260
  %264 = vset.pattern.permute.xlu0 0
  %265 = vperm.xlu0 %264, %v80
  %v266 = vpop.permute.xlu0 %265
  %269 = vset.pattern.permute.xlu0 0
  %270 = vperm.xlu0 %269, %v81
  %v271 = vpop.permute.xlu0 %270
  %274 = vset.pattern.permute.xlu0 0
  %275 = vperm.xlu0 %274, %v82
  %v276 = vpop.permute.xlu0 %275
  %v278 = vadd.f32 %v200, %v261
  %v279 = vadd.f32 %v202, %v261
  %v280 = vadd.f32 %v204, %v266
  %v281 = vadd.f32 %v206, %v266
  %v282 = vadd.f32 %v210, %v271
  %v283 = vadd.f32 %v212, %v271
  %v284 = vadd.f32 %v214, %v276
  %v285 = vadd.f32 %v216, %v276
  %v286 = vpack.c.bf16 %v224, %v220
  %v287 = vpack.c.bf16 %v226, %v222
  %v288 = vpack.c.bf16 %v234, %v230
  %v289 = vpack.c.bf16 %v236, %v232
  %v290 = vpack.c.bf16 %v244, %v240
  %v291 = vpack.c.bf16 %v246, %v242
  %v292 = vpack.c.bf16 %v254, %v250
  %v293 = vpack.c.bf16 %v256, %v252
  %v326 = vunpack.c.l.b16 %v47
  %v327 = vunpack.c.h.b16 %v47
  %v328 = vunpack.c.l.b16 %v48
  %v329 = vunpack.c.h.b16 %v48
  %v330 = vunpack.c.l.b16 %v49
  %v331 = vunpack.c.h.b16 %v49
  %v332 = vunpack.c.l.b16 %v50
  %v333 = vunpack.c.h.b16 %v50
  %v334 = vunpack.c.l.b16 %v51
  %v335 = vunpack.c.h.b16 %v51
  %v336 = vunpack.c.l.b16 %v52
  %v337 = vunpack.c.h.b16 %v52
  %v338 = vunpack.c.l.b16 %v53
  %v339 = vunpack.c.h.b16 %v53
  %v340 = vunpack.c.l.b16 %v54
  %v341 = vunpack.c.h.b16 %v54
  %v342 = vunpack.c.l.b16 %v55
  %v343 = vunpack.c.h.b16 %v55
  %v344 = vunpack.c.l.b16 %v56
  %v345 = vunpack.c.h.b16 %v56
  %v346 = vunpack.c.l.b16 %v57
  %v347 = vunpack.c.h.b16 %v57
  %v348 = vunpack.c.l.b16 %v58
  %v349 = vunpack.c.h.b16 %v58
  %v350 = vunpack.c.l.b16 %v59
  %v351 = vunpack.c.h.b16 %v59
  %v352 = vunpack.c.l.b16 %v60
  %v353 = vunpack.c.h.b16 %v60
  %v354 = vunpack.c.l.b16 %v61
  %v355 = vunpack.c.h.b16 %v61
  %v356 = vunpack.c.l.b16 %v62
  %v357 = vunpack.c.h.b16 %v62
  %v358 = vunpack.c.l.b16 %v63
  %v359 = vunpack.c.h.b16 %v63
  %v360 = vunpack.c.l.b16 %v64
  %v361 = vunpack.c.h.b16 %v64
  %v362 = vunpack.c.l.b16 %v65
  %v363 = vunpack.c.h.b16 %v65
  %v364 = vunpack.c.l.b16 %v66
  %v365 = vunpack.c.h.b16 %v66
  %v366 = vunpack.c.l.b16 %v67
  %v367 = vunpack.c.h.b16 %v67
  %v368 = vunpack.c.l.b16 %v68
  %v369 = vunpack.c.h.b16 %v68
  %v370 = vunpack.c.l.b16 %v69
  %v371 = vunpack.c.h.b16 %v69
  %v372 = vunpack.c.l.b16 %v70
  %v373 = vunpack.c.h.b16 %v70
  %v374 = vunpack.c.l.b16 %v71
  %v375 = vunpack.c.h.b16 %v71
  %v376 = vunpack.c.l.b16 %v72
  %v377 = vunpack.c.h.b16 %v72
  %v378 = vunpack.c.l.b16 %v73
  %v379 = vunpack.c.h.b16 %v73
  %v380 = vunpack.c.l.b16 %v74
  %v381 = vunpack.c.h.b16 %v74
  %v382 = vunpack.c.l.b16 %v75
  %v383 = vunpack.c.h.b16 %v75
  %v384 = vunpack.c.l.b16 %v76
  %v385 = vunpack.c.h.b16 %v76
  %v386 = vunpack.c.l.b16 %v77
  %v387 = vunpack.c.h.b16 %v77
  %v388 = vunpack.c.l.b16 %v78
  %v389 = vunpack.c.h.b16 %v78
  %v390 = vpack.c.b16 %v328, %v326
  %v391 = vpack.c.b16 %v329, %v327
  %v392 = vpack.c.b16 %v332, %v330
  %v393 = vpack.c.b16 %v333, %v331
  %v394 = vpack.c.b16 %v336, %v334
  %v395 = vpack.c.b16 %v337, %v335
  %v396 = vpack.c.b16 %v340, %v338
  %v397 = vpack.c.b16 %v341, %v339
  %v398 = vpack.c.b16 %v344, %v342
  %v399 = vpack.c.b16 %v345, %v343
  %v400 = vpack.c.b16 %v348, %v346
  %v401 = vpack.c.b16 %v349, %v347
  %v402 = vpack.c.b16 %v352, %v350
  %v403 = vpack.c.b16 %v353, %v351
  %v404 = vpack.c.b16 %v356, %v354
  %v405 = vpack.c.b16 %v357, %v355
  %v406 = vpack.c.b16 %v360, %v358
  %v407 = vpack.c.b16 %v361, %v359
  %v408 = vpack.c.b16 %v364, %v362
  %v409 = vpack.c.b16 %v365, %v363
  %v410 = vpack.c.b16 %v368, %v366
  %v411 = vpack.c.b16 %v369, %v367
  %v412 = vpack.c.b16 %v372, %v370
  %v413 = vpack.c.b16 %v373, %v371
  %v414 = vpack.c.b16 %v376, %v374
  %v415 = vpack.c.b16 %v377, %v375
  %v416 = vpack.c.b16 %v380, %v378
  %v417 = vpack.c.b16 %v381, %v379
  %v418 = vpack.c.b16 %v384, %v382
  %v419 = vpack.c.b16 %v385, %v383
  %v420 = vpack.c.b16 %v388, %v386
  %v421 = vpack.c.b16 %v389, %v387
  %454 = vmatprep.subr.bf16.mxu0 %v287
  %455 = vmatpush1.bf16.xpose.msra.mxu0 %v286
  %456 = vmatprep.subr.bf16.mxu0 %v289
  %457 = vmatpush1.bf16.xpose.msra.mxu0 %v288
  %458 = vmatprep.subr.bf16.mxu0 %v291
  %459 = vmatpush1.bf16.xpose.msra.mxu0 %v290
  %460 = vmatprep.subr.bf16.mxu0 %v293
  %461 = vmatpush1.bf16.xpose.msra.mxu0 %v292
  %462 = vmatprep.subr.bf16.mxu0 0
  %463 = vmatpush1.bf16.xpose.msra.mxu0 0
  %464 = vmatprep.subr.bf16.mxu0 0
  %465 = vmatpush1.bf16.xpose.msra.mxu0 0
  %466 = vmatprep.subr.bf16.mxu0 0
  %467 = vmatpush1.bf16.xpose.msra.mxu0 0
  %468 = vmatprep.subr.bf16.mxu0 0
  %469 = vmatpush1.bf16.xpose.msra.mxu0 0
  %470 = vmatprep.subr.bf16.mxu0 0
  %471 = vmatpush1.bf16.xpose.msra.mxu0 0
  %472 = vmatprep.subr.bf16.mxu0 0
  %473 = vmatpush1.bf16.xpose.msra.mxu0 0
  %474 = vmatprep.subr.bf16.mxu0 0
  %475 = vmatpush1.bf16.xpose.msra.mxu0 0
  %476 = vmatprep.subr.bf16.mxu0 0
  %477 = vmatpush1.bf16.xpose.msra.mxu0 0
  %478 = vmatprep.subr.bf16.mxu0 0
  %479 = vmatpush1.bf16.xpose.msra.mxu0 0
  %480 = vmatprep.subr.bf16.mxu0 0
  %481 = vmatpush1.bf16.xpose.msra.mxu0 0
  %482 = vmatprep.subr.bf16.mxu0 0
  %483 = vmatpush1.bf16.xpose.msra.mxu0 0
  %484 = vmatprep.subr.bf16.mxu0 0
  %485 = vmatpush1.bf16.xpose.msra.mxu0 0
  %486 = vmatprep.mubr.bf16.mxu0 %v391
  %487 = vmatmul.mubr.bf16.gmra.mrb[0].mxu0 %v390
  %v488 = vpop.f32.mrb[0].mxu0
  %v489 = vadd.f32 0.0, %v488
  %v490 = vpop.f32.mrb[0].mxu0
  %v491 = vpop.f32.mrb[0].mxu0
  %v492 = vadd.f32 0.0, %v491
  %v493 = vpop.f32.mrb[0].mxu0
  %494 = vmatprep.mubr.bf16.mxu0 %v393
  %495 = vmatmul.mubr.bf16.gmra.mrb[0].mxu0 %v392
  %v496 = vpop.f32.mrb[0].mxu0
  %v497 = vadd.f32 0.0, %v496
  %v498 = vpop.f32.mrb[0].mxu0
  %v499 = vpop.f32.mrb[0].mxu0
  %v500 = vadd.f32 0.0, %v499
  %v501 = vpop.f32.mrb[0].mxu0
  %502 = vmatprep.mubr.bf16.mxu0 %v395
  %503 = vmatmul.mubr.bf16.gmra.mrb[0].mxu0 %v394
  %v504 = vpop.f32.mrb[0].mxu0
  %v505 = vadd.f32 0.0, %v504
  %v506 = vpop.f32.mrb[0].mxu0
  %v507 = vpop.f32.mrb[0].mxu0
  %v508 = vadd.f32 0.0, %v507
  %v509 = vpop.f32.mrb[0].mxu0
  %510 = vmatprep.mubr.bf16.mxu0 %v397
  %511 = vmatmul.mubr.bf16.gmra.mrb[0].mxu0 %v396
  %v512 = vpop.f32.mrb[0].mxu0
  %v513 = vadd.f32 0.0, %v512
  %v514 = vpop.f32.mrb[0].mxu0
  %v515 = vpop.f32.mrb[0].mxu0
  %v516 = vadd.f32 0.0, %v515
  %v517 = vpop.f32.mrb[0].mxu0
  %518 = vmatprep.mubr.bf16.mxu0 %v399
  %519 = vmatmul.mubr.bf16.gmra.mrb[0].mxu0 %v398
  %v520 = vpop.f32.mrb[0].mxu0
  %v521 = vadd.f32 0.0, %v520
  %v522 = vpop.f32.mrb[0].mxu0
  %v523 = vpop.f32.mrb[0].mxu0
  %v524 = vadd.f32 0.0, %v523
  %v525 = vpop.f32.mrb[0].mxu0
  %526 = vmatprep.mubr.bf16.mxu0 %v401
  %527 = vmatmul.mubr.bf16.gmra.mrb[0].mxu0 %v400
  %v528 = vpop.f32.mrb[0].mxu0
  %v529 = vadd.f32 0.0, %v528
  %v530 = vpop.f32.mrb[0].mxu0
  %v531 = vpop.f32.mrb[0].mxu0
  %v532 = vadd.f32 0.0, %v531
  %v533 = vpop.f32.mrb[0].mxu0
  %534 = vmatprep.mubr.bf16.mxu0 %v403
  %535 = vmatmul.mubr.bf16.gmra.mrb[0].mxu0 %v402
  %v536 = vpop.f32.mrb[0].mxu0
  %v537 = vadd.f32 0.0, %v536
  %v538 = vpop.f32.mrb[0].mxu0
  %v539 = vpop.f32.mrb[0].mxu0
  %v540 = vadd.f32 0.0, %v539
  %v541 = vpop.f32.mrb[0].mxu0
  %542 = vmatprep.mubr.bf16.mxu0 %v405
  %543 = vmatmul.mubr.bf16.gmra.mrb[0].mxu0 %v404
  %v544 = vpop.f32.mrb[0].mxu0
  %v545 = vadd.f32 0.0, %v544
  %v546 = vpop.f32.mrb[0].mxu0
  %v547 = vpop.f32.mrb[0].mxu0
  %v548 = vadd.f32 0.0, %v547
  %v549 = vpop.f32.mrb[0].mxu0
  %550 = vmatprep.mubr.bf16.mxu0 %v407
  %551 = vmatmul.mubr.bf16.gmra.mrb[0].mxu0 %v406
  %v552 = vpop.f32.mrb[0].mxu0
  %v553 = vadd.f32 0.0, %v552
  %v554 = vpop.f32.mrb[0].mxu0
  %v555 = vpop.f32.mrb[0].mxu0
  %v556 = vadd.f32 0.0, %v555
  %v557 = vpop.f32.mrb[0].mxu0
  %558 = vmatprep.mubr.bf16.mxu0 %v409
  %559 = vmatmul.mubr.bf16.gmra.mrb[0].mxu0 %v408
  %v560 = vpop.f32.mrb[0].mxu0
  %v561 = vadd.f32 0.0, %v560
  %v562 = vpop.f32.mrb[0].mxu0
  %v563 = vpop.f32.mrb[0].mxu0
  %v564 = vadd.f32 0.0, %v563
  %v565 = vpop.f32.mrb[0].mxu0
  %566 = vmatprep.mubr.bf16.mxu0 %v411
  %567 = vmatmul.mubr.bf16.gmra.mrb[0].mxu0 %v410
  %v568 = vpop.f32.mrb[0].mxu0
  %v569 = vadd.f32 0.0, %v568
  %v570 = vpop.f32.mrb[0].mxu0
  %v571 = vpop.f32.mrb[0].mxu0
  %v572 = vadd.f32 0.0, %v571
  %v573 = vpop.f32.mrb[0].mxu0
  %574 = vmatprep.mubr.bf16.mxu0 %v413
  %575 = vmatmul.mubr.bf16.gmra.mrb[0].mxu0 %v412
  %v576 = vpop.f32.mrb[0].mxu0
  %v577 = vadd.f32 0.0, %v576
  %v578 = vpop.f32.mrb[0].mxu0
  %v579 = vpop.f32.mrb[0].mxu0
  %v580 = vadd.f32 0.0, %v579
  %v581 = vpop.f32.mrb[0].mxu0
  %582 = vmatprep.mubr.bf16.mxu0 %v415
  %583 = vmatmul.mubr.bf16.gmra.mrb[0].mxu0 %v414
  %v584 = vpop.f32.mrb[0].mxu0
  %v585 = vadd.f32 0.0, %v584
  %v586 = vpop.f32.mrb[0].mxu0
  %v587 = vpop.f32.mrb[0].mxu0
  %v588 = vadd.f32 0.0, %v587
  %v589 = vpop.f32.mrb[0].mxu0
  %590 = vmatprep.mubr.bf16.mxu0 %v417
  %591 = vmatmul.mubr.bf16.gmra.mrb[0].mxu0 %v416
  %v592 = vpop.f32.mrb[0].mxu0
  %v593 = vadd.f32 0.0, %v592
  %v594 = vpop.f32.mrb[0].mxu0
  %v595 = vpop.f32.mrb[0].mxu0
  %v596 = vadd.f32 0.0, %v595
  %v597 = vpop.f32.mrb[0].mxu0
  %598 = vmatprep.mubr.bf16.mxu0 %v419
  %599 = vmatmul.mubr.bf16.gmra.mrb[0].mxu0 %v418
  %v600 = vpop.f32.mrb[0].mxu0
  %v601 = vadd.f32 0.0, %v600
  %v602 = vpop.f32.mrb[0].mxu0
  %v603 = vpop.f32.mrb[0].mxu0
  %v604 = vadd.f32 0.0, %v603
  %v605 = vpop.f32.mrb[0].mxu0
  %606 = vmatprep.mubr.bf16.mxu0 %v421
  %607 = vmatmul.mubr.bf16.gmra.mrb[0].mxu0 %v420
  %v608 = vpop.f32.mrb[0].mxu0
  %v609 = vadd.f32 0.0, %v608
  %v610 = vpop.f32.mrb[0].mxu0
  %v611 = vpop.f32.mrb[0].mxu0
  %v612 = vadd.f32 0.0, %v611
  %v613 = vpop.f32.mrb[0].mxu0
  %614 = vdwg.mxu0
  %v615 = vsel %vm146, %v489, -inf
  %v616 = vsel %vm146, %v521, -inf
  %v617 = vmax.f32 %v615, %v616
  %v618 = vsel %vm146, %v553, -inf
  %v619 = vmax.f32 %v617, %v618
  %v620 = vsel %vm146, %v585, -inf
  %v621 = vmax.f32 %v619, %v620
  %v622 = vsel %vm146, %v492, -inf
  %v623 = vsel %vm146, %v524, -inf
  %v624 = vmax.f32 %v622, %v623
  %v625 = vsel %vm146, %v556, -inf
  %v626 = vmax.f32 %v624, %v625
  %v627 = vsel %vm146, %v588, -inf
  %v628 = vmax.f32 %v626, %v627
  %v629 = vsel %vm146, %v497, -inf
  %v630 = vsel %vm146, %v529, -inf
  %v631 = vmax.f32 %v629, %v630
  %v632 = vsel %vm146, %v561, -inf
  %v633 = vmax.f32 %v631, %v632
  %v634 = vsel %vm146, %v593, -inf
  %v635 = vmax.f32 %v633, %v634
  %v636 = vsel %vm146, %v500, -inf
  %v637 = vsel %vm146, %v532, -inf
  %v638 = vmax.f32 %v636, %v637
  %v639 = vsel %vm146, %v564, -inf
  %v640 = vmax.f32 %v638, %v639
  %v641 = vsel %vm146, %v596, -inf
  %v642 = vmax.f32 %v640, %v641
  %v643 = vsel %vm146, %v505, -inf
  %v644 = vsel %vm146, %v537, -inf
  %v645 = vmax.f32 %v643, %v644
  %v646 = vsel %vm146, %v569, -inf
  %v647 = vmax.f32 %v645, %v646
  %v648 = vsel %vm146, %v601, -inf
  %v649 = vmax.f32 %v647, %v648
  %v650 = vsel %vm146, %v508, -inf
  %v651 = vsel %vm146, %v540, -inf
  %v652 = vmax.f32 %v650, %v651
  %v653 = vsel %vm146, %v572, -inf
  %v654 = vmax.f32 %v652, %v653
  %v655 = vsel %vm146, %v604, -inf
  %v656 = vmax.f32 %v654, %v655
  %v657 = vsel %vm146, %v513, -inf
  %v658 = vsel %vm146, %v545, -inf
  %v659 = vmax.f32 %v657, %v658
  %v660 = vsel %vm146, %v577, -inf
  %v661 = vmax.f32 %v659, %v660
  %v662 = vsel %vm146, %v609, -inf
  %v663 = vmax.f32 %v661, %v662
  %v664 = vsel %vm146, %v516, -inf
  %v665 = vsel %vm146, %v548, -inf
  %v666 = vmax.f32 %v664, %v665
  %v667 = vsel %vm146, %v580, -inf
  %v668 = vmax.f32 %v666, %v667
  %v669 = vsel %vm146, %v612, -inf
  %v670 = vmax.f32 %v668, %v669
  %v672 = vlaneseq
  %v673 = vshrl.u32 %v672, 7
  %v674 = vsub.s32 0, %v673
  %v675 = vrot.slane %v83, %v674
  %676 = vrot.lane.b32.xlu0 %v675, 32
  %v677 = vpop.permute.xlu0 %676
  %v679 = vadd.f32 %v621, %v677
  %v680 = vadd.f32 %v628, %v677
  %v681 = vadd.f32 %v635, %v677
  %v682 = vadd.f32 %v642, %v677
  %v683 = vadd.f32 %v649, %v677
  %v684 = vadd.f32 %v656, %v677
  %v685 = vadd.f32 %v663, %v677
  %v686 = vadd.f32 %v670, %v677
  %v687 = vpack.c.bf16 %v628, %v621
  %v688 = vpack.c.bf16 %v642, %v635
  %v689 = vpack.c.bf16 %v656, %v649
  %v690 = vpack.c.bf16 %v670, %v663
  %v691 = vpack.c.bf16 %v280, %v278
  %v692 = vpack.c.bf16 %v281, %v279
  %v693 = vpack.c.bf16 %v284, %v282
  %v694 = vpack.c.bf16 %v285, %v283
  %vm695 = vcmask 261120
  %v697 = vsel %vm695, %v687, 0
  %v700 = vsel %vm695, %v688, 0
  %v703 = vsel %vm695, %v689, 0
  %v706 = vsel %vm695, %v690, 0
  %708 = vmatprep.subr.bf16.mxu0 %v692
  %709 = vmatpush1.bf16.msra.mxu0 %v691
  %710 = vmatprep.subr.bf16.mxu0 %v694
  %711 = vmatpush1.bf16.msra.mxu0 %v693
  %712 = vmatprep.subr.bf16.mxu0 0
  %713 = vmatpush1.bf16.msra.mxu0 0
  %714 = vmatprep.subr.bf16.mxu0 0
  %715 = vmatpush1.bf16.msra.mxu0 0
  %716 = vmatprep.subr.bf16.mxu0 0
  %717 = vmatpush1.bf16.msra.mxu0 0
  %718 = vmatprep.subr.bf16.mxu0 0
  %719 = vmatpush1.bf16.msra.mxu0 0
  %720 = vmatprep.subr.bf16.mxu0 0
  %721 = vmatpush1.bf16.msra.mxu0 0
  %722 = vmatprep.subr.bf16.mxu0 0
  %723 = vmatpush1.bf16.msra.mxu0 0
  %724 = vmatprep.subr.bf16.mxu0 0
  %725 = vmatpush1.bf16.msra.mxu0 0
  %726 = vmatprep.subr.bf16.mxu0 0
  %727 = vmatpush1.bf16.msra.mxu0 0
  %728 = vmatprep.subr.bf16.mxu0 0
  %729 = vmatpush1.bf16.msra.mxu0 0
  %730 = vmatprep.subr.bf16.mxu0 0
  %731 = vmatpush1.bf16.msra.mxu0 0
  %732 = vmatprep.subr.bf16.mxu0 0
  %733 = vmatpush1.bf16.msra.mxu0 0
  %734 = vmatprep.subr.bf16.mxu0 0
  %735 = vmatpush1.bf16.msra.mxu0 0
  %736 = vmatprep.subr.bf16.mxu0 0
  %737 = vmatpush1.bf16.msra.mxu0 0
  %738 = vmatprep.subr.bf16.mxu0 0
  %739 = vmatpush1.bf16.msra.mxu0 0
  %740 = vmatprep.mubr.bf16.mxu0 0
  %741 = vmatmul.mubr.bf16.gmra.mrb[0].mxu0 %v697
  %v742 = vpop.f32.mrb[0].mxu0
  %v743 = vadd.f32 0.0, %v742
  %v744 = vpop.f32.mrb[0].mxu0
  %v745 = vadd.f32 0.0, %v744
  %v746 = vpop.f32.mrb[0].mxu0
  %v747 = vadd.f32 0.0, %v746
  %v748 = vpop.f32.mrb[0].mxu0
  %v749 = vadd.f32 0.0, %v748
  %750 = vmatprep.mubr.bf16.mxu0 0
  %751 = vmatmul.mubr.bf16.gmra.mrb[0].mxu0 %v700
  %v752 = vpop.f32.mrb[0].mxu0
  %v753 = vadd.f32 0.0, %v752
  %v754 = vpop.f32.mrb[0].mxu0
  %v755 = vadd.f32 0.0, %v754
  %v756 = vpop.f32.mrb[0].mxu0
  %v757 = vadd.f32 0.0, %v756
  %v758 = vpop.f32.mrb[0].mxu0
  %v759 = vadd.f32 0.0, %v758
  %760 = vmatprep.mubr.bf16.mxu0 0
  %761 = vmatmul.mubr.bf16.gmra.mrb[0].mxu0 %v703
  %v762 = vpop.f32.mrb[0].mxu0
  %v763 = vadd.f32 0.0, %v762
  %v764 = vpop.f32.mrb[0].mxu0
  %v765 = vadd.f32 0.0, %v764
  %v766 = vpop.f32.mrb[0].mxu0
  %v767 = vadd.f32 0.0, %v766
  %v768 = vpop.f32.mrb[0].mxu0
  %v769 = vadd.f32 0.0, %v768
  %770 = vmatprep.mubr.bf16.mxu0 0
  %771 = vmatmul.mubr.bf16.gmra.mrb[0].mxu0 %v706
  %v772 = vpop.f32.mrb[0].mxu0
  %v773 = vadd.f32 0.0, %v772
  %v774 = vpop.f32.mrb[0].mxu0
  %v775 = vadd.f32 0.0, %v774
  %v776 = vpop.f32.mrb[0].mxu0
  %v777 = vadd.f32 0.0, %v776
  %v778 = vpop.f32.mrb[0].mxu0
  %v779 = vadd.f32 0.0, %v778
  %780 = vdwg.mxu0
  %v781 = vmax.f32 %v743, %v753
  %v782 = vmax.f32 %v747, %v757
  %v783 = vmax.f32 %v781, %v763
  %v784 = vmax.f32 %v782, %v767
  %v785 = vmax.f32 %v783, %v773
  %v786 = vmax.f32 %v784, %v777
  %v787 = vmax.f32 %v785, %v786
  %v788 = vrot.slane %v787, 4
  %v789 = vmax.f32 %v787, %v788
  %v790 = vrot.slane %v789, 2
  %v791 = vmax.f32 %v789, %v790
  %v792 = vrot.slane %v791, 1
  %v793 = vmax.f32 %v791, %v792
  %v794 = vmax.f32 %v745, %v755
  %v795 = vmax.f32 %v749, %v759
  %v796 = vmax.f32 %v794, %v765
  %v797 = vmax.f32 %v795, %v769
  %v798 = vmax.f32 %v796, %v775
  %v799 = vmax.f32 %v797, %v779
  %v800 = vmax.f32 %v798, %v799
  %v801 = vrot.slane %v800, 4
  %v802 = vmax.f32 %v800, %v801
  %v803 = vrot.slane %v802, 2
  %v804 = vmax.f32 %v802, %v803
  %v805 = vrot.slane %v804, 1
  %v806 = vmax.f32 %v804, %v805
  %v807 = vsub.f32 %v743, %v793
  %v808 = vsub.f32 %v745, %v806
  %v809 = vsub.f32 %v747, %v793
  %v810 = vsub.f32 %v749, %v806
  %v811 = vsub.f32 %v753, %v793
  %v812 = vsub.f32 %v755, %v806
  %v813 = vsub.f32 %v757, %v793
  %v814 = vsub.f32 %v759, %v806
  %v815 = vsub.f32 %v763, %v793
  %v816 = vsub.f32 %v765, %v806
  %v817 = vsub.f32 %v767, %v793
  %v818 = vsub.f32 %v769, %v806
  %v819 = vsub.f32 %v773, %v793
  %v820 = vsub.f32 %v775, %v806
  %v821 = vsub.f32 %v777, %v793
  %v822 = vsub.f32 %v779, %v806
  %v823 = vmul.f32 %v807, 1.442695
  %v824 = vpow.pop %v823
  %v825 = vmul.f32 %v808, 1.442695
  %v826 = vpow.pop %v825
  %v827 = vmul.f32 %v809, 1.442695
  %v828 = vpow.pop %v827
  %v829 = vmul.f32 %v810, 1.442695
  %v830 = vpow.pop %v829
  %v831 = vmul.f32 %v811, 1.442695
  %v832 = vpow.pop %v831
  %v833 = vmul.f32 %v812, 1.442695
  %v834 = vpow.pop %v833
  %v835 = vmul.f32 %v813, 1.442695
  %v836 = vpow.pop %v835
  %v837 = vmul.f32 %v814, 1.442695
  %v838 = vpow.pop %v837
  %v839 = vmul.f32 %v815, 1.442695
  %v840 = vpow.pop %v839
  %v841 = vmul.f32 %v816, 1.442695
  %v842 = vpow.pop %v841
  %v843 = vmul.f32 %v817, 1.442695
  %v844 = vpow.pop %v843
  %v845 = vmul.f32 %v818, 1.442695
  %v846 = vpow.pop %v845
  %v847 = vmul.f32 %v819, 1.442695
  %v848 = vpow.pop %v847
  %v849 = vmul.f32 %v820, 1.442695
  %v850 = vpow.pop %v849
  %v851 = vmul.f32 %v821, 1.442695
  %v852 = vpow.pop %v851
  %v853 = vmul.f32 %v822, 1.442695
  %v854 = vpow.pop %v853
  %v855 = vadd.f32 %v824, %v828
  %v856 = vadd.f32 %v855, %v832
  %v857 = vadd.f32 %v856, %v836
  %v858 = vadd.f32 %v857, %v840
  %v859 = vadd.f32 %v858, %v844
  %v860 = vadd.f32 %v859, %v848
  %v861 = vadd.f32 %v860, %v852
  %v862 = vrot.slane %v861, 4
  %v863 = vadd.f32 %v861, %v862
  %v864 = vrot.slane %v863, 2
  %v865 = vadd.f32 %v863, %v864
  %v866 = vrot.slane %v865, 1
  %v867 = vadd.f32 %v865, %v866
  %v868 = vadd.f32 %v826, %v830
  %v869 = vadd.f32 %v868, %v834
  %v870 = vadd.f32 %v869, %v838
  %v871 = vadd.f32 %v870, %v842
  %v872 = vadd.f32 %v871, %v846
  %v873 = vadd.f32 %v872, %v850
  %v874 = vadd.f32 %v873, %v854
  %v875 = vrot.slane %v874, 4
  %v876 = vadd.f32 %v874, %v875
  %v877 = vrot.slane %v876, 2
  %v878 = vadd.f32 %v876, %v877
  %v879 = vrot.slane %v878, 1
  %v880 = vadd.f32 %v878, %v879
  %889 = vrot.lane.b32.xlu0 %v679, 96
  %v890 = vpop.permute.xlu0 %889
  %891 = vrot.lane.b32.xlu0 %v680, 96
  %v892 = vpop.permute.xlu0 %891
  %893 = vrot.lane.b32.xlu0 %v681, 96
  %v894 = vpop.permute.xlu0 %893
  %895 = vrot.lane.b32.xlu0 %v682, 96
  %v896 = vpop.permute.xlu0 %895
  %897 = vrot.lane.b32.xlu0 %v683, 96
  %v898 = vpop.permute.xlu0 %897
  %899 = vrot.lane.b32.xlu0 %v684, 96
  %v900 = vpop.permute.xlu0 %899
  %901 = vrot.lane.b32.xlu0 %v685, 96
  %v902 = vpop.permute.xlu0 %901
  %903 = vrot.lane.b32.xlu0 %v686, 96
  %v904 = vpop.permute.xlu0 %903
  %913 = vxpose.xlu0.b32.start [1/16] %v890, 128
  %914 = vxpose.xlu0.b32.cont [2/16] %v892, 128
  %915 = vxpose.xlu0.b32.cont [3/16] %v894, 128
  %916 = vxpose.xlu0.b32.cont [4/16] %v896, 128
  %917 = vxpose.xlu0.b32.cont [5/16] %v898, 128
  %918 = vxpose.xlu0.b32.cont [6/16] %v900, 128
  %919 = vxpose.xlu0.b32.cont [7/16] %v902, 128
  %920 = vxpose.xlu0.b32.cont [8/16] %v904, 128
  %921 = vxpose.xlu0.b32.cont [9/16] 0.0, 128
  %922 = vxpose.xlu0.b32.cont [10/16] 0.0, 128
  %923 = vxpose.xlu0.b32.cont [11/16] 0.0, 128
  %924 = vxpose.xlu0.b32.cont [12/16] 0.0, 128
  %925 = vxpose.xlu0.b32.cont [13/16] 0.0, 128
  %926 = vxpose.xlu0.b32.cont [14/16] 0.0, 128
  %927 = vxpose.xlu0.b32.cont [15/16] 0.0, 128
  %928 = vxpose.xlu0.b32.end [16/16] 0.0, 128
  %v929 = vpop.trf.xlu0
  %v930 = vpop.trf.xlu0
  %v931 = vpop.trf.xlu0
  %v932 = vpop.trf.xlu0
  %v933 = vpop.trf.xlu0
  %v934 = vpop.trf.xlu0
  %v935 = vpop.trf.xlu0
  %v936 = vpop.trf.xlu0
  %v937 = vpop.trf.xlu0
  %v938 = vpop.trf.xlu0
  %v939 = vpop.trf.xlu0
  %v940 = vpop.trf.xlu0
  %v941 = vpop.trf.xlu0
  %v942 = vpop.trf.xlu0
  %v943 = vpop.trf.xlu0
  %v944 = vpop.trf.xlu0
  %v945 = vpack.c.bf16 %v930, %v929
  %v946 = vpack.c.bf16 %v932, %v931
  %v947 = vpack.c.bf16 %v828, %v824
  %v948 = vpack.c.bf16 %v830, %v826
  %v949 = vpack.c.bf16 %v836, %v832
  %v950 = vpack.c.bf16 %v838, %v834
  %v951 = vpack.c.bf16 %v844, %v840
  %v952 = vpack.c.bf16 %v846, %v842
  %v953 = vpack.c.bf16 %v852, %v848
  %v954 = vpack.c.bf16 %v854, %v850
  %v956 = vsel %vm146, %v945, 0
  %v959 = vsel %vm146, %v946, 0
  %961 = vmatprep.subr.bf16.mxu0 %v948
  %962 = vmatpush1.bf16.msra.mxu0 %v947
  %963 = vmatprep.subr.bf16.mxu0 %v950
  %964 = vmatpush1.bf16.msra.mxu0 %v949
  %965 = vmatprep.subr.bf16.mxu0 %v952
  %966 = vmatpush1.bf16.msra.mxu0 %v951
  %967 = vmatprep.subr.bf16.mxu0 %v954
  %968 = vmatpush1.bf16.msra.mxu0 %v953
  %969 = vmatprep.subr.bf16.mxu0 0
  %970 = vmatpush1.bf16.msra.mxu0 0
  %971 = vmatprep.subr.bf16.mxu0 0
  %972 = vmatpush1.bf16.msra.mxu0 0
  %973 = vmatprep.subr.bf16.mxu0 0
  %974 = vmatpush1.bf16.msra.mxu0 0
  %975 = vmatprep.subr.bf16.mxu0 0
  %976 = vmatpush1.bf16.msra.mxu0 0
  %977 = vmatprep.subr.bf16.mxu0 0
  %978 = vmatpush1.bf16.msra.mxu0 0
  %979 = vmatprep.subr.bf16.mxu0 0
  %980 = vmatpush1.bf16.msra.mxu0 0
  %981 = vmatprep.subr.bf16.mxu0 0
  %982 = vmatpush1.bf16.msra.mxu0 0
  %983 = vmatprep.subr.bf16.mxu0 0
  %984 = vmatpush1.bf16.msra.mxu0 0
  %985 = vmatprep.subr.bf16.mxu0 0
  %986 = vmatpush1.bf16.msra.mxu0 0
  %987 = vmatprep.subr.bf16.mxu0 0
  %988 = vmatpush1.bf16.msra.mxu0 0
  %989 = vmatprep.subr.bf16.mxu0 0
  %990 = vmatpush1.bf16.msra.mxu0 0
  %991 = vmatprep.subr.bf16.mxu0 0
  %992 = vmatpush1.bf16.msra.mxu0 0
  %993 = vmatprep.mubr.bf16.mxu0 0
  %994 = vmatmul.mubr.bf16.gmra.mrb[0].mxu0 %v956
  %v995 = vpop.f32.mrb[0].mxu0
  %v996 = vadd.f32 0.0, %v995
  %v997 = vpop.f32.mrb[0].mxu0
  %v998 = vadd.f32 0.0, %v997
  %v999 = vpop.f32.mrb[0].mxu0
  %v1000 = vadd.f32 0.0, %v999
  %v1001 = vpop.f32.mrb[0].mxu0
  %v1002 = vadd.f32 0.0, %v1001
  %1003 = vmatprep.mubr.bf16.mxu0 0
  %1004 = vmatmul.mubr.bf16.gmra.mrb[0].mxu0 %v959
  %v1005 = vpop.f32.mrb[0].mxu0
  %v1006 = vadd.f32 0.0, %v1005
  %v1007 = vpop.f32.mrb[0].mxu0
  %v1008 = vadd.f32 0.0, %v1007
  %v1009 = vpop.f32.mrb[0].mxu0
  %v1010 = vadd.f32 0.0, %v1009
  %v1011 = vpop.f32.mrb[0].mxu0
  %v1012 = vadd.f32 0.0, %v1011
  %1013 = vdwg.mxu0
  %v1014 = vrcp.pop %v867
  %v1015 = vrcp.pop %v880
  %v1016 = vmul.f32 %v996, %v1014
  %v1017 = vmul.f32 %v998, %v1015
  %v1018 = vmul.f32 %v1000, %v1014
  %v1019 = vmul.f32 %v1002, %v1015
  %v1020 = vmul.f32 %v1006, %v1014
  %v1021 = vmul.f32 %v1008, %v1015
  %v1022 = vmul.f32 %v1010, %v1014
  %v1023 = vmul.f32 %v1012, %v1015
  %v1024 = vpack.c.bf16 %v1018, %v1016
  %v1025 = vpack.c.bf16 %v1019, %v1017
  %v1026 = vpack.c.bf16 %v1022, %v1020
  %v1027 = vpack.c.bf16 %v1023, %v1021
  %1029 = vset.pattern.permute.xlu0 0
  %1030 = vperm.xlu0 %1029, %v84
  %v1031 = vpop.permute.xlu0 %1030
  %1034 = vset.pattern.permute.xlu0 0
  %1035 = vperm.xlu0 %1034, %v85
  %v1036 = vpop.permute.xlu0 %1035
  %1039 = vset.pattern.permute.xlu0 0
  %1040 = vperm.xlu0 %1039, %v86
  %v1041 = vpop.permute.xlu0 %1040
  %1044 = vset.pattern.permute.xlu0 0
  %1045 = vperm.xlu0 %1044, %v87
  %v1046 = vpop.permute.xlu0 %1045
  %1049 = vset.pattern.permute.xlu0 0
  %1050 = vperm.xlu0 %1049, %v88
  %v1051 = vpop.permute.xlu0 %1050
  %1054 = vset.pattern.permute.xlu0 0
  %1055 = vperm.xlu0 %1054, %v89
  %v1056 = vpop.permute.xlu0 %1055
  %1059 = vset.pattern.permute.xlu0 0
  %1060 = vperm.xlu0 %1059, %v90
  %v1061 = vpop.permute.xlu0 %1060
  %1064 = vset.pattern.permute.xlu0 0
  %1065 = vperm.xlu0 %1064, %v91
  %v1066 = vpop.permute.xlu0 %1065
  %v1076 = vunpack.c.l.b16 %v39
  %v1077 = vunpack.c.l.b16 %v40
  %v1078 = vunpack.c.l.b16 %v41
  %v1079 = vunpack.c.l.b16 %v42
  %v1080 = vunpack.c.l.b16 %v43
  %v1081 = vunpack.c.l.b16 %v44
  %v1082 = vunpack.c.l.b16 %v45
  %v1083 = vunpack.c.l.b16 %v46
  %v1084 = vpack.c.b16 %v1077, %v1076
  %v1085 = vpack.c.b16 %v1079, %v1078
  %v1086 = vpack.c.b16 %v1081, %v1080
  %v1087 = vpack.c.b16 %v1083, %v1082
  %v1089 = vsel %vm695, %v1084, 0
  %v1092 = vsel %vm695, %v1085, 0
  %v1095 = vsel %vm695, %v1086, 0
  %v1098 = vsel %vm695, %v1087, 0
  %1100 = vmatprep.subr.bf16.mxu0 %v1025
  %1101 = vmatpush1.bf16.msra.mxu0 %v1024
  %1102 = vmatprep.subr.bf16.mxu0 %v1027
  %1103 = vmatpush1.bf16.msra.mxu0 %v1026
  %1104 = vmatprep.subr.bf16.mxu0 0
  %1105 = vmatpush1.bf16.msra.mxu0 0
  %1106 = vmatprep.subr.bf16.mxu0 0
  %1107 = vmatpush1.bf16.msra.mxu0 0
  %1108 = vmatprep.subr.bf16.mxu0 0
  %1109 = vmatpush1.bf16.msra.mxu0 0
  %1110 = vmatprep.subr.bf16.mxu0 0
  %1111 = vmatpush1.bf16.msra.mxu0 0
  %1112 = vmatprep.subr.bf16.mxu0 0
  %1113 = vmatpush1.bf16.msra.mxu0 0
  %1114 = vmatprep.subr.bf16.mxu0 0
  %1115 = vmatpush1.bf16.msra.mxu0 0
  %1116 = vmatprep.subr.bf16.mxu0 0
  %1117 = vmatpush1.bf16.msra.mxu0 0
  %1118 = vmatprep.subr.bf16.mxu0 0
  %1119 = vmatpush1.bf16.msra.mxu0 0
  %1120 = vmatprep.subr.bf16.mxu0 0
  %1121 = vmatpush1.bf16.msra.mxu0 0
  %1122 = vmatprep.subr.bf16.mxu0 0
  %1123 = vmatpush1.bf16.msra.mxu0 0
  %1124 = vmatprep.subr.bf16.mxu0 0
  %1125 = vmatpush1.bf16.msra.mxu0 0
  %1126 = vmatprep.subr.bf16.mxu0 0
  %1127 = vmatpush1.bf16.msra.mxu0 0
  %1128 = vmatprep.subr.bf16.mxu0 0
  %1129 = vmatpush1.bf16.msra.mxu0 0
  %1130 = vmatprep.subr.bf16.mxu0 0
  %1131 = vmatpush1.bf16.msra.mxu0 0
  %1132 = vmatprep.mubr.bf16.mxu0 0
  %1133 = vmatmul.mubr.bf16.gmra.mrb[0].mxu0 %v1089
  %v1134 = vpop.f32.mrb[0].mxu0
  %v1135 = vadd.f32 %v1031, %v1134
  %v1136 = vpop.f32.mrb[0].mxu0
  %v1137 = vadd.f32 %v1031, %v1136
  %v1138 = vpop.f32.mrb[0].mxu0
  %v1139 = vadd.f32 %v1036, %v1138
  %v1140 = vpop.f32.mrb[0].mxu0
  %v1141 = vadd.f32 %v1036, %v1140
  %1142 = vmatprep.mubr.bf16.mxu0 0
  %1143 = vmatmul.mubr.bf16.gmra.mrb[0].mxu0 %v1092
  %v1144 = vpop.f32.mrb[0].mxu0
  %v1145 = vadd.f32 %v1041, %v1144
  %v1146 = vpop.f32.mrb[0].mxu0
  %v1147 = vadd.f32 %v1041, %v1146
  %v1148 = vpop.f32.mrb[0].mxu0
  %v1149 = vadd.f32 %v1046, %v1148
  %v1150 = vpop.f32.mrb[0].mxu0
  %v1151 = vadd.f32 %v1046, %v1150
  %1152 = vmatprep.mubr.bf16.mxu0 0
  %1153 = vmatmul.mubr.bf16.gmra.mrb[0].mxu0 %v1095
  %v1154 = vpop.f32.mrb[0].mxu0
  %v1155 = vadd.f32 %v1051, %v1154
  %v1156 = vpop.f32.mrb[0].mxu0
  %v1157 = vadd.f32 %v1051, %v1156
  %v1158 = vpop.f32.mrb[0].mxu0
  %v1159 = vadd.f32 %v1056, %v1158
  %v1160 = vpop.f32.mrb[0].mxu0
  %v1161 = vadd.f32 %v1056, %v1160
  %1162 = vmatprep.mubr.bf16.mxu0 0
  %1163 = vmatmul.mubr.bf16.gmra.mrb[0].mxu0 %v1098
  %v1164 = vpop.f32.mrb[0].mxu0
  %v1165 = vadd.f32 %v1061, %v1164
  %v1166 = vpop.f32.mrb[0].mxu0
  %v1167 = vadd.f32 %v1061, %v1166
  %v1168 = vpop.f32.mrb[0].mxu0
  %v1169 = vadd.f32 %v1066, %v1168
  %v1170 = vpop.f32.mrb[0].mxu0
  %v1171 = vadd.f32 %v1066, %v1170
  %1172 = vdwg.mxu0
  %v1173 = vadd.f32 %v1135, %v92
  %v1174 = vadd.f32 %v1137, %v93
  %v1175 = vadd.f32 %v1139, %v94
  %v1176 = vadd.f32 %v1141, %v95
  %v1177 = vadd.f32 %v1145, %v96
  %v1178 = vadd.f32 %v1147, %v97
  %v1179 = vadd.f32 %v1149, %v98
  %v1180 = vadd.f32 %v1151, %v99
  %v1181 = vadd.f32 %v1155, %v100
  %v1182 = vadd.f32 %v1157, %v101
  %v1183 = vadd.f32 %v1159, %v102
  %v1184 = vadd.f32 %v1161, %v103
  %v1185 = vadd.f32 %v1165, %v104
  %v1186 = vadd.f32 %v1167, %v105
  %v1187 = vadd.f32 %v1169, %v106
  %v1188 = vadd.f32 %v1171, %v107
  %1189 = vst [vmem:[%s7] sm:$0xff] %v1173
  %1190 = vst [vmem:[%s7 + $0x8] sm:$0xff] %v1174
  %1191 = vst [vmem:[%s7 + $0x10] sm:$0xff] %v1175
  %1192 = vst [vmem:[%s7 + $0x18] sm:$0xff] %v1176
  %1193 = vst [vmem:[%s7 + $0x20] sm:$0xff] %v1177
  %1194 = vst [vmem:[%s7 + $0x28] sm:$0xff] %v1178
  %1195 = vst [vmem:[%s7 + $0x30] sm:$0xff] %v1179
  %1196 = vst [vmem:[%s7 + $0x38] sm:$0xff] %v1180
  %1197 = vst [vmem:[%s7 + $0x40] sm:$0xff] %v1181
  %1198 = vst [vmem:[%s7 + $0x48] sm:$0xff] %v1182
  %1199 = vst [vmem:[%s7 + $0x50] sm:$0xff] %v1183
  %1200 = vst [vmem:[%s7 + $0x58] sm:$0xff] %v1184
  %1201 = vst [vmem:[%s7 + $0x60] sm:$0xff] %v1185
  %1202 = vst [vmem:[%s7 + $0x68] sm:$0xff] %v1186
  %1203 = vst [vmem:[%s7 + $0x70] sm:$0xff] %v1187
  %1204 = vst [vmem:[%s7 + $0x78] sm:$0xff] %v1188
  %s1205 = scalar_lea.vmem %s0, 128
  %v1206 = vld [vmem:[%s1205] sm:$0xff]
  %v1207 = vld [vmem:[%s1205 + $0x8] sm:$0xff]
  %v1208 = vld [vmem:[%s1205 + $0x10] sm:$0xff]
  %v1209 = vld [vmem:[%s1205 + $0x18] sm:$0xff]
  %v1210 = vld [vmem:[%s1205 + $0x20] sm:$0xff]
  %v1211 = vld [vmem:[%s1205 + $0x28] sm:$0xff]
  %v1212 = vld [vmem:[%s1205 + $0x30] sm:$0xff]
  %v1213 = vld [vmem:[%s1205 + $0x38] sm:$0xff]
  %v1214 = vld [vmem:[%s1205 + $0x40] sm:$0xff]
  %v1215 = vld [vmem:[%s1205 + $0x48] sm:$0xff]
  %v1216 = vld [vmem:[%s1205 + $0x50] sm:$0xff]
  %v1217 = vld [vmem:[%s1205 + $0x58] sm:$0xff]
  %v1218 = vld [vmem:[%s1205 + $0x60] sm:$0xff]
  %v1219 = vld [vmem:[%s1205 + $0x68] sm:$0xff]
  %v1220 = vld [vmem:[%s1205 + $0x70] sm:$0xff]
  %v1221 = vld [vmem:[%s1205 + $0x78] sm:$0xff]
  %v1222 = vpack.c.bf16 %v1208, %v1206
  %v1223 = vpack.c.bf16 %v1209, %v1207
  %v1224 = vpack.c.bf16 %v1212, %v1210
  %v1225 = vpack.c.bf16 %v1213, %v1211
  %v1226 = vpack.c.bf16 %v1216, %v1214
  %v1227 = vpack.c.bf16 %v1217, %v1215
  %v1228 = vpack.c.bf16 %v1220, %v1218
  %v1229 = vpack.c.bf16 %v1221, %v1219
  %1230 = vmatprep.subr.bf16.mxu0 %v1223
  %1231 = vmatpush1.bf16.msra.mxu0 %v1222
  %1232 = vmatprep.subr.bf16.mxu0 %v1225
  %1233 = vmatpush1.bf16.msra.mxu0 %v1224
  %1234 = vmatprep.subr.bf16.mxu0 %v1227
  %1235 = vmatpush1.bf16.msra.mxu0 %v1226
  %1236 = vmatprep.subr.bf16.mxu0 %v1229
  %1237 = vmatpush1.bf16.msra.mxu0 %v1228
  %1238 = vmatprep.subr.bf16.mxu0 0
  %1239 = vmatpush1.bf16.msra.mxu0 0
  %1240 = vmatprep.subr.bf16.mxu0 0
  %1241 = vmatpush1.bf16.msra.mxu0 0
  %1242 = vmatprep.subr.bf16.mxu0 0
  %1243 = vmatpush1.bf16.msra.mxu0 0
  %1244 = vmatprep.subr.bf16.mxu0 0
  %1245 = vmatpush1.bf16.msra.mxu0 0
  %1246 = vmatprep.subr.bf16.mxu0 0
  %1247 = vmatpush1.bf16.msra.mxu0 0
  %1248 = vmatprep.subr.bf16.mxu0 0
  %1249 = vmatpush1.bf16.msra.mxu0 0
  %1250 = vmatprep.subr.bf16.mxu0 0
  %1251 = vmatpush1.bf16.msra.mxu0 0
  %1252 = vmatprep.subr.bf16.mxu0 0
  %1253 = vmatpush1.bf16.msra.mxu0 0
  %1254 = vmatprep.subr.bf16.mxu0 0
  %1255 = vmatpush1.bf16.msra.mxu0 0
  %1256 = vmatprep.subr.bf16.mxu0 0
  %1257 = vmatpush1.bf16.msra.mxu0 0
  %1258 = vmatprep.subr.bf16.mxu0 0
  %1259 = vmatpush1.bf16.msra.mxu0 0
  %1260 = vmatprep.subr.bf16.mxu0 0
  %1261 = vmatpush1.bf16.msra.mxu0 0
  %1262 = vmatprep.mubr.bf16.mxu0 0
  %1263 = vmatmul.mubr.bf16.gmra.mrb[0].mxu0 %v148
  %v1264 = vpop.f32.mrb[0].mxu0
  %v1265 = vadd.f32 0.0, %v1264
  %v1266 = vpop.f32.mrb[0].mxu0
  %v1267 = vadd.f32 0.0, %v1266
  %v1268 = vpop.f32.mrb[0].mxu0
  %v1269 = vadd.f32 0.0, %v1268
  %v1270 = vpop.f32.mrb[0].mxu0
  %v1271 = vadd.f32 0.0, %v1270
  %1272 = vmatprep.mubr.bf16.mxu0 0
  %1273 = vmatmul.mubr.bf16.gmra.mrb[0].mxu0 %v151
  %v1274 = vpop.f32.mrb[0].mxu0
  %v1275 = vadd.f32 0.0, %v1274
  %v1276 = vpop.f32.mrb[0].mxu0
  %v1277 = vadd.f32 0.0, %v1276
  %v1278 = vpop.f32.mrb[0].mxu0
  %v1279 = vadd.f32 0.0, %v1278
  %v1280 = vpop.f32.mrb[0].mxu0
  %v1281 = vadd.f32 0.0, %v1280
  %1282 = vmatprep.mubr.bf16.mxu0 0
  %1283 = vmatmul.mubr.bf16.gmra.mrb[0].mxu0 %v154
  %v1284 = vpop.f32.mrb[0].mxu0
  %v1285 = vadd.f32 0.0, %v1284
  %v1286 = vpop.f32.mrb[0].mxu0
  %v1287 = vadd.f32 0.0, %v1286
  %v1288 = vpop.f32.mrb[0].mxu0
  %v1289 = vadd.f32 0.0, %v1288
  %v1290 = vpop.f32.mrb[0].mxu0
  %v1291 = vadd.f32 0.0, %v1290
  %1292 = vmatprep.mubr.bf16.mxu0 0
  %1293 = vmatmul.mubr.bf16.gmra.mrb[0].mxu0 %v157
  %v1294 = vpop.f32.mrb[0].mxu0
  %v1295 = vadd.f32 0.0, %v1294
  %v1296 = vpop.f32.mrb[0].mxu0
  %v1297 = vadd.f32 0.0, %v1296
  %v1298 = vpop.f32.mrb[0].mxu0
  %v1299 = vadd.f32 0.0, %v1298
  %v1300 = vpop.f32.mrb[0].mxu0
  %v1301 = vadd.f32 0.0, %v1300
  %1302 = vmatprep.mubr.bf16.mxu0 0
  %1303 = vmatmul.mubr.bf16.gmra.mrb[0].mxu0 %v160
  %v1304 = vpop.f32.mrb[0].mxu0
  %v1305 = vadd.f32 0.0, %v1304
  %v1306 = vpop.f32.mrb[0].mxu0
  %v1307 = vadd.f32 0.0, %v1306
  %v1308 = vpop.f32.mrb[0].mxu0
  %v1309 = vadd.f32 0.0, %v1308
  %v1310 = vpop.f32.mrb[0].mxu0
  %v1311 = vadd.f32 0.0, %v1310
  %1312 = vmatprep.mubr.bf16.mxu0 0
  %1313 = vmatmul.mubr.bf16.gmra.mrb[0].mxu0 %v163
  %v1314 = vpop.f32.mrb[0].mxu0
  %v1315 = vadd.f32 0.0, %v1314
  %v1316 = vpop.f32.mrb[0].mxu0
  %v1317 = vadd.f32 0.0, %v1316
  %v1318 = vpop.f32.mrb[0].mxu0
  %v1319 = vadd.f32 0.0, %v1318
  %v1320 = vpop.f32.mrb[0].mxu0
  %v1321 = vadd.f32 0.0, %v1320
  %1322 = vdwg.mxu0
  %v1323 = vadd.f32 %v1265, %v261
  %v1324 = vadd.f32 %v1267, %v261
  %v1325 = vadd.f32 %v1269, %v266
  %v1326 = vadd.f32 %v1271, %v266
  %v1327 = vadd.f32 %v1275, %v271
  %v1328 = vadd.f32 %v1277, %v271
  %v1329 = vadd.f32 %v1279, %v276
  %v1330 = vadd.f32 %v1281, %v276
  %v1331 = vpack.c.bf16 %v1289, %v1285
  %v1332 = vpack.c.bf16 %v1291, %v1287
  %v1333 = vpack.c.bf16 %v1299, %v1295
  %v1334 = vpack.c.bf16 %v1301, %v1297
  %v1335 = vpack.c.bf16 %v1309, %v1305
  %v1336 = vpack.c.bf16 %v1311, %v1307
  %v1337 = vpack.c.bf16 %v1319, %v1315
  %v1338 = vpack.c.bf16 %v1321, %v1317
  %1339 = vmatprep.subr.bf16.mxu0 %v1332
  %1340 = vmatpush1.bf16.xpose.msra.mxu0 %v1331
  %1341 = vmatprep.subr.bf16.mxu0 %v1334
  %1342 = vmatpush1.bf16.xpose.msra.mxu0 %v1333
  %1343 = vmatprep.subr.bf16.mxu0 %v1336
  %1344 = vmatpush1.bf16.xpose.msra.mxu0 %v1335
  %1345 = vmatprep.subr.bf16.mxu0 %v1338
  %1346 = vmatpush1.bf16.xpose.msra.mxu0 %v1337
  %1347 = vmatprep.subr.bf16.mxu0 0
  %1348 = vmatpush1.bf16.xpose.msra.mxu0 0
  %1349 = vmatprep.subr.bf16.mxu0 0
  %1350 = vmatpush1.bf16.xpose.msra.mxu0 0
  %1351 = vmatprep.subr.bf16.mxu0 0
  %1352 = vmatpush1.bf16.xpose.msra.mxu0 0
  %1353 = vmatprep.subr.bf16.mxu0 0
  %1354 = vmatpush1.bf16.xpose.msra.mxu0 0
  %1355 = vmatprep.subr.bf16.mxu0 0
  %1356 = vmatpush1.bf16.xpose.msra.mxu0 0
  %1357 = vmatprep.subr.bf16.mxu0 0
  %1358 = vmatpush1.bf16.xpose.msra.mxu0 0
  %1359 = vmatprep.subr.bf16.mxu0 0
  %1360 = vmatpush1.bf16.xpose.msra.mxu0 0
  %1361 = vmatprep.subr.bf16.mxu0 0
  %1362 = vmatpush1.bf16.xpose.msra.mxu0 0
  %1363 = vmatprep.subr.bf16.mxu0 0
  %1364 = vmatpush1.bf16.xpose.msra.mxu0 0
  %1365 = vmatprep.subr.bf16.mxu0 0
  %1366 = vmatpush1.bf16.xpose.msra.mxu0 0
  %1367 = vmatprep.subr.bf16.mxu0 0
  %1368 = vmatpush1.bf16.xpose.msra.mxu0 0
  %1369 = vmatprep.subr.bf16.mxu0 0
  %1370 = vmatpush1.bf16.xpose.msra.mxu0 0
  %1371 = vmatprep.mubr.bf16.mxu0 %v391
  %1372 = vmatmul.mubr.bf16.gmra.mrb[0].mxu0 %v390
  %v1373 = vpop.f32.mrb[0].mxu0
  %v1374 = vadd.f32 0.0, %v1373
  %v1375 = vpop.f32.mrb[0].mxu0
  %v1376 = vpop.f32.mrb[0].mxu0
  %v1377 = vadd.f32 0.0, %v1376
  %v1378 = vpop.f32.mrb[0].mxu0
  %1379 = vmatprep.mubr.bf16.mxu0 %v393
  %1380 = vmatmul.mubr.bf16.gmra.mrb[0].mxu0 %v392
  %v1381 = vpop.f32.mrb[0].mxu0
  %v1382 = vadd.f32 0.0, %v1381
  %v1383 = vpop.f32.mrb[0].mxu0
  %v1384 = vpop.f32.mrb[0].mxu0
  %v1385 = vadd.f32 0.0, %v1384
  %v1386 = vpop.f32.mrb[0].mxu0
  %1387 = vmatprep.mubr.bf16.mxu0 %v395
  %1388 = vmatmul.mubr.bf16.gmra.mrb[0].mxu0 %v394
  %v1389 = vpop.f32.mrb[0].mxu0
  %v1390 = vadd.f32 0.0, %v1389
  %v1391 = vpop.f32.mrb[0].mxu0
  %v1392 = vpop.f32.mrb[0].mxu0
  %v1393 = vadd.f32 0.0, %v1392
  %v1394 = vpop.f32.mrb[0].mxu0
  %1395 = vmatprep.mubr.bf16.mxu0 %v397
  %1396 = vmatmul.mubr.bf16.gmra.mrb[0].mxu0 %v396
  %v1397 = vpop.f32.mrb[0].mxu0
  %v1398 = vadd.f32 0.0, %v1397
  %v1399 = vpop.f32.mrb[0].mxu0
  %v1400 = vpop.f32.mrb[0].mxu0
  %v1401 = vadd.f32 0.0, %v1400
  %v1402 = vpop.f32.mrb[0].mxu0
  %1403 = vmatprep.mubr.bf16.mxu0 %v399
  %1404 = vmatmul.mubr.bf16.gmra.mrb[0].mxu0 %v398
  %v1405 = vpop.f32.mrb[0].mxu0
  %v1406 = vadd.f32 0.0, %v1405
  %v1407 = vpop.f32.mrb[0].mxu0
  %v1408 = vpop.f32.mrb[0].mxu0
  %v1409 = vadd.f32 0.0, %v1408
  %v1410 = vpop.f32.mrb[0].mxu0
  %1411 = vmatprep.mubr.bf16.mxu0 %v401
  %1412 = vmatmul.mubr.bf16.gmra.mrb[0].mxu0 %v400
  %v1413 = vpop.f32.mrb[0].mxu0
  %v1414 = vadd.f32 0.0, %v1413
  %v1415 = vpop.f32.mrb[0].mxu0
  %v1416 = vpop.f32.mrb[0].mxu0
  %v1417 = vadd.f32 0.0, %v1416
  %v1418 = vpop.f32.mrb[0].mxu0
  %1419 = vmatprep.mubr.bf16.mxu0 %v403
  %1420 = vmatmul.mubr.bf16.gmra.mrb[0].mxu0 %v402
  %v1421 = vpop.f32.mrb[0].mxu0
  %v1422 = vadd.f32 0.0, %v1421
  %v1423 = vpop.f32.mrb[0].mxu0
  %v1424 = vpop.f32.mrb[0].mxu0
  %v1425 = vadd.f32 0.0, %v1424
  %v1426 = vpop.f32.mrb[0].mxu0
  %1427 = vmatprep.mubr.bf16.mxu0 %v405
  %1428 = vmatmul.mubr.bf16.gmra.mrb[0].mxu0 %v404
  %v1429 = vpop.f32.mrb[0].mxu0
  %v1430 = vadd.f32 0.0, %v1429
  %v1431 = vpop.f32.mrb[0].mxu0
  %v1432 = vpop.f32.mrb[0].mxu0
  %v1433 = vadd.f32 0.0, %v1432
  %v1434 = vpop.f32.mrb[0].mxu0
  %1435 = vmatprep.mubr.bf16.mxu0 %v407
  %1436 = vmatmul.mubr.bf16.gmra.mrb[0].mxu0 %v406
  %v1437 = vpop.f32.mrb[0].mxu0
  %v1438 = vadd.f32 0.0, %v1437
  %v1439 = vpop.f32.mrb[0].mxu0
  %v1440 = vpop.f32.mrb[0].mxu0
  %v1441 = vadd.f32 0.0, %v1440
  %v1442 = vpop.f32.mrb[0].mxu0
  %1443 = vmatprep.mubr.bf16.mxu0 %v409
  %1444 = vmatmul.mubr.bf16.gmra.mrb[0].mxu0 %v408
  %v1445 = vpop.f32.mrb[0].mxu0
  %v1446 = vadd.f32 0.0, %v1445
  %v1447 = vpop.f32.mrb[0].mxu0
  %v1448 = vpop.f32.mrb[0].mxu0
  %v1449 = vadd.f32 0.0, %v1448
  %v1450 = vpop.f32.mrb[0].mxu0
  %1451 = vmatprep.mubr.bf16.mxu0 %v411
  %1452 = vmatmul.mubr.bf16.gmra.mrb[0].mxu0 %v410
  %v1453 = vpop.f32.mrb[0].mxu0
  %v1454 = vadd.f32 0.0, %v1453
  %v1455 = vpop.f32.mrb[0].mxu0
  %v1456 = vpop.f32.mrb[0].mxu0
  %v1457 = vadd.f32 0.0, %v1456
  %v1458 = vpop.f32.mrb[0].mxu0
  %1459 = vmatprep.mubr.bf16.mxu0 %v413
  %1460 = vmatmul.mubr.bf16.gmra.mrb[0].mxu0 %v412
  %v1461 = vpop.f32.mrb[0].mxu0
  %v1462 = vadd.f32 0.0, %v1461
  %v1463 = vpop.f32.mrb[0].mxu0
  %v1464 = vpop.f32.mrb[0].mxu0
  %v1465 = vadd.f32 0.0, %v1464
  %v1466 = vpop.f32.mrb[0].mxu0
  %1467 = vmatprep.mubr.bf16.mxu0 %v415
  %1468 = vmatmul.mubr.bf16.gmra.mrb[0].mxu0 %v414
  %v1469 = vpop.f32.mrb[0].mxu0
  %v1470 = vadd.f32 0.0, %v1469
  %v1471 = vpop.f32.mrb[0].mxu0
  %v1472 = vpop.f32.mrb[0].mxu0
  %v1473 = vadd.f32 0.0, %v1472
  %v1474 = vpop.f32.mrb[0].mxu0
  %1475 = vmatprep.mubr.bf16.mxu0 %v417
  %1476 = vmatmul.mubr.bf16.gmra.mrb[0].mxu0 %v416
  %v1477 = vpop.f32.mrb[0].mxu0
  %v1478 = vadd.f32 0.0, %v1477
  %v1479 = vpop.f32.mrb[0].mxu0
  %v1480 = vpop.f32.mrb[0].mxu0
  %v1481 = vadd.f32 0.0, %v1480
  %v1482 = vpop.f32.mrb[0].mxu0
  %1483 = vmatprep.mubr.bf16.mxu0 %v419
  %1484 = vmatmul.mubr.bf16.gmra.mrb[0].mxu0 %v418
  %v1485 = vpop.f32.mrb[0].mxu0
  %v1486 = vadd.f32 0.0, %v1485
  %v1487 = vpop.f32.mrb[0].mxu0
  %v1488 = vpop.f32.mrb[0].mxu0
  %v1489 = vadd.f32 0.0, %v1488
  %v1490 = vpop.f32.mrb[0].mxu0
  %1491 = vmatprep.mubr.bf16.mxu0 %v421
  %1492 = vmatmul.mubr.bf16.gmra.mrb[0].mxu0 %v420
  %v1493 = vpop.f32.mrb[0].mxu0
  %v1494 = vadd.f32 0.0, %v1493
  %v1495 = vpop.f32.mrb[0].mxu0
  %v1496 = vpop.f32.mrb[0].mxu0
  %v1497 = vadd.f32 0.0, %v1496
  %v1498 = vpop.f32.mrb[0].mxu0
  %1499 = vdwg.mxu0
  %v1500 = vsel %vm146, %v1374, -inf
  %v1501 = vsel %vm146, %v1406, -inf
  %v1502 = vmax.f32 %v1500, %v1501
  %v1503 = vsel %vm146, %v1438, -inf
  %v1504 = vmax.f32 %v1502, %v1503
  %v1505 = vsel %vm146, %v1470, -inf
  %v1506 = vmax.f32 %v1504, %v1505
  %v1507 = vsel %vm146, %v1377, -inf
  %v1508 = vsel %vm146, %v1409, -inf
  %v1509 = vmax.f32 %v1507, %v1508
  %v1510 = vsel %vm146, %v1441, -inf
  %v1511 = vmax.f32 %v1509, %v1510
  %v1512 = vsel %vm146, %v1473, -inf
  %v1513 = vmax.f32 %v1511, %v1512
  %v1514 = vsel %vm146, %v1382, -inf
  %v1515 = vsel %vm146, %v1414, -inf
  %v1516 = vmax.f32 %v1514, %v1515
  %v1517 = vsel %vm146, %v1446, -inf
  %v1518 = vmax.f32 %v1516, %v1517
  %v1519 = vsel %vm146, %v1478, -inf
  %v1520 = vmax.f32 %v1518, %v1519
  %v1521 = vsel %vm146, %v1385, -inf
  %v1522 = vsel %vm146, %v1417, -inf
  %v1523 = vmax.f32 %v1521, %v1522
  %v1524 = vsel %vm146, %v1449, -inf
  %v1525 = vmax.f32 %v1523, %v1524
  %v1526 = vsel %vm146, %v1481, -inf
  %v1527 = vmax.f32 %v1525, %v1526
  %v1528 = vsel %vm146, %v1390, -inf
  %v1529 = vsel %vm146, %v1422, -inf
  %v1530 = vmax.f32 %v1528, %v1529
  %v1531 = vsel %vm146, %v1454, -inf
  %v1532 = vmax.f32 %v1530, %v1531
  %v1533 = vsel %vm146, %v1486, -inf
  %v1534 = vmax.f32 %v1532, %v1533
  %v1535 = vsel %vm146, %v1393, -inf
  %v1536 = vsel %vm146, %v1425, -inf
  %v1537 = vmax.f32 %v1535, %v1536
  %v1538 = vsel %vm146, %v1457, -inf
  %v1539 = vmax.f32 %v1537, %v1538
  %v1540 = vsel %vm146, %v1489, -inf
  %v1541 = vmax.f32 %v1539, %v1540
  %v1542 = vsel %vm146, %v1398, -inf
  %v1543 = vsel %vm146, %v1430, -inf
  %v1544 = vmax.f32 %v1542, %v1543
  %v1545 = vsel %vm146, %v1462, -inf
  %v1546 = vmax.f32 %v1544, %v1545
  %v1547 = vsel %vm146, %v1494, -inf
  %v1548 = vmax.f32 %v1546, %v1547
  %v1549 = vsel %vm146, %v1401, -inf
  %v1550 = vsel %vm146, %v1433, -inf
  %v1551 = vmax.f32 %v1549, %v1550
  %v1552 = vsel %vm146, %v1465, -inf
  %v1553 = vmax.f32 %v1551, %v1552
  %v1554 = vsel %vm146, %v1497, -inf
  %v1555 = vmax.f32 %v1553, %v1554
  %v1556 = vadd.f32 %v1506, %v677
  %v1557 = vadd.f32 %v1513, %v677
  %v1558 = vadd.f32 %v1520, %v677
  %v1559 = vadd.f32 %v1527, %v677
  %v1560 = vadd.f32 %v1534, %v677
  %v1561 = vadd.f32 %v1541, %v677
  %v1562 = vadd.f32 %v1548, %v677
  %v1563 = vadd.f32 %v1555, %v677
  %v1564 = vpack.c.bf16 %v1513, %v1506
  %v1565 = vpack.c.bf16 %v1527, %v1520
  %v1566 = vpack.c.bf16 %v1541, %v1534
  %v1567 = vpack.c.bf16 %v1555, %v1548
  %v1568 = vpack.c.bf16 %v1325, %v1323
  %v1569 = vpack.c.bf16 %v1326, %v1324
  %v1570 = vpack.c.bf16 %v1329, %v1327
  %v1571 = vpack.c.bf16 %v1330, %v1328
  %v1573 = vsel %vm695, %v1564, 0
  %v1576 = vsel %vm695, %v1565, 0
  %v1579 = vsel %vm695, %v1566, 0
  %v1582 = vsel %vm695, %v1567, 0
  %1584 = vmatprep.subr.bf16.mxu0 %v1569
  %1585 = vmatpush1.bf16.msra.mxu0 %v1568
  %1586 = vmatprep.subr.bf16.mxu0 %v1571
  %1587 = vmatpush1.bf16.msra.mxu0 %v1570
  %1588 = vmatprep.subr.bf16.mxu0 0
  %1589 = vmatpush1.bf16.msra.mxu0 0
  %1590 = vmatprep.subr.bf16.mxu0 0
  %1591 = vmatpush1.bf16.msra.mxu0 0
  %1592 = vmatprep.subr.bf16.mxu0 0
  %1593 = vmatpush1.bf16.msra.mxu0 0
  %1594 = vmatprep.subr.bf16.mxu0 0
  %1595 = vmatpush1.bf16.msra.mxu0 0
  %1596 = vmatprep.subr.bf16.mxu0 0
  %1597 = vmatpush1.bf16.msra.mxu0 0
  %1598 = vmatprep.subr.bf16.mxu0 0
  %1599 = vmatpush1.bf16.msra.mxu0 0
  %1600 = vmatprep.subr.bf16.mxu0 0
  %1601 = vmatpush1.bf16.msra.mxu0 0
  %1602 = vmatprep.subr.bf16.mxu0 0
  %1603 = vmatpush1.bf16.msra.mxu0 0
  %1604 = vmatprep.subr.bf16.mxu0 0
  %1605 = vmatpush1.bf16.msra.mxu0 0
  %1606 = vmatprep.subr.bf16.mxu0 0
  %1607 = vmatpush1.bf16.msra.mxu0 0
  %1608 = vmatprep.subr.bf16.mxu0 0
  %1609 = vmatpush1.bf16.msra.mxu0 0
  %1610 = vmatprep.subr.bf16.mxu0 0
  %1611 = vmatpush1.bf16.msra.mxu0 0
  %1612 = vmatprep.subr.bf16.mxu0 0
  %1613 = vmatpush1.bf16.msra.mxu0 0
  %1614 = vmatprep.subr.bf16.mxu0 0
  %1615 = vmatpush1.bf16.msra.mxu0 0
  %1616 = vmatprep.mubr.bf16.mxu0 0
  %1617 = vmatmul.mubr.bf16.gmra.mrb[0].mxu0 %v1573
  %v1618 = vpop.f32.mrb[0].mxu0
  %v1619 = vadd.f32 0.0, %v1618
  %v1620 = vpop.f32.mrb[0].mxu0
  %v1621 = vadd.f32 0.0, %v1620
  %v1622 = vpop.f32.mrb[0].mxu0
  %v1623 = vadd.f32 0.0, %v1622
  %v1624 = vpop.f32.mrb[0].mxu0
  %v1625 = vadd.f32 0.0, %v1624
  %1626 = vmatprep.mubr.bf16.mxu0 0
  %1627 = vmatmul.mubr.bf16.gmra.mrb[0].mxu0 %v1576
  %v1628 = vpop.f32.mrb[0].mxu0
  %v1629 = vadd.f32 0.0, %v1628
  %v1630 = vpop.f32.mrb[0].mxu0
  %v1631 = vadd.f32 0.0, %v1630
  %v1632 = vpop.f32.mrb[0].mxu0
  %v1633 = vadd.f32 0.0, %v1632
  %v1634 = vpop.f32.mrb[0].mxu0
  %v1635 = vadd.f32 0.0, %v1634
  %1636 = vmatprep.mubr.bf16.mxu0 0
  %1637 = vmatmul.mubr.bf16.gmra.mrb[0].mxu0 %v1579
  %v1638 = vpop.f32.mrb[0].mxu0
  %v1639 = vadd.f32 0.0, %v1638
  %v1640 = vpop.f32.mrb[0].mxu0
  %v1641 = vadd.f32 0.0, %v1640
  %v1642 = vpop.f32.mrb[0].mxu0
  %v1643 = vadd.f32 0.0, %v1642
  %v1644 = vpop.f32.mrb[0].mxu0
  %v1645 = vadd.f32 0.0, %v1644
  %1646 = vmatprep.mubr.bf16.mxu0 0
  %1647 = vmatmul.mubr.bf16.gmra.mrb[0].mxu0 %v1582
  %v1648 = vpop.f32.mrb[0].mxu0
  %v1649 = vadd.f32 0.0, %v1648
  %v1650 = vpop.f32.mrb[0].mxu0
  %v1651 = vadd.f32 0.0, %v1650
  %v1652 = vpop.f32.mrb[0].mxu0
  %v1653 = vadd.f32 0.0, %v1652
  %v1654 = vpop.f32.mrb[0].mxu0
  %v1655 = vadd.f32 0.0, %v1654
  %1656 = vdwg.mxu0
  %v1657 = vmax.f32 %v1619, %v1629
  %v1658 = vmax.f32 %v1623, %v1633
  %v1659 = vmax.f32 %v1657, %v1639
  %v1660 = vmax.f32 %v1658, %v1643
  %v1661 = vmax.f32 %v1659, %v1649
  %v1662 = vmax.f32 %v1660, %v1653
  %v1663 = vmax.f32 %v1661, %v1662
  %v1664 = vrot.slane %v1663, 4
  %v1665 = vmax.f32 %v1663, %v1664
  %v1666 = vrot.slane %v1665, 2
  %v1667 = vmax.f32 %v1665, %v1666
  %v1668 = vrot.slane %v1667, 1
  %v1669 = vmax.f32 %v1667, %v1668
  %v1670 = vmax.f32 %v1621, %v1631
  %v1671 = vmax.f32 %v1625, %v1635
  %v1672 = vmax.f32 %v1670, %v1641
  %v1673 = vmax.f32 %v1671, %v1645
  %v1674 = vmax.f32 %v1672, %v1651
  %v1675 = vmax.f32 %v1673, %v1655
  %v1676 = vmax.f32 %v1674, %v1675
  %v1677 = vrot.slane %v1676, 4
  %v1678 = vmax.f32 %v1676, %v1677
  %v1679 = vrot.slane %v1678, 2
  %v1680 = vmax.f32 %v1678, %v1679
  %v1681 = vrot.slane %v1680, 1
  %v1682 = vmax.f32 %v1680, %v1681
  %v1683 = vsub.f32 %v1619, %v1669
  %v1684 = vsub.f32 %v1621, %v1682
  %v1685 = vsub.f32 %v1623, %v1669
  %v1686 = vsub.f32 %v1625, %v1682
  %v1687 = vsub.f32 %v1629, %v1669
  %v1688 = vsub.f32 %v1631, %v1682
  %v1689 = vsub.f32 %v1633, %v1669
  %v1690 = vsub.f32 %v1635, %v1682
  %v1691 = vsub.f32 %v1639, %v1669
  %v1692 = vsub.f32 %v1641, %v1682
  %v1693 = vsub.f32 %v1643, %v1669
  %v1694 = vsub.f32 %v1645, %v1682
  %v1695 = vsub.f32 %v1649, %v1669
  %v1696 = vsub.f32 %v1651, %v1682
  %v1697 = vsub.f32 %v1653, %v1669
  %v1698 = vsub.f32 %v1655, %v1682
  %v1699 = vmul.f32 %v1683, 1.442695
  %v1700 = vpow.pop %v1699
  %v1701 = vmul.f32 %v1684, 1.442695
  %v1702 = vpow.pop %v1701
  %v1703 = vmul.f32 %v1685, 1.442695
  %v1704 = vpow.pop %v1703
  %v1705 = vmul.f32 %v1686, 1.442695
  %v1706 = vpow.pop %v1705
  %v1707 = vmul.f32 %v1687, 1.442695
  %v1708 = vpow.pop %v1707
  %v1709 = vmul.f32 %v1688, 1.442695
  %v1710 = vpow.pop %v1709
  %v1711 = vmul.f32 %v1689, 1.442695
  %v1712 = vpow.pop %v1711
  %v1713 = vmul.f32 %v1690, 1.442695
  %v1714 = vpow.pop %v1713
  %v1715 = vmul.f32 %v1691, 1.442695
  %v1716 = vpow.pop %v1715
  %v1717 = vmul.f32 %v1692, 1.442695
  %v1718 = vpow.pop %v1717
  %v1719 = vmul.f32 %v1693, 1.442695
  %v1720 = vpow.pop %v1719
  %v1721 = vmul.f32 %v1694, 1.442695
  %v1722 = vpow.pop %v1721
  %v1723 = vmul.f32 %v1695, 1.442695
  %v1724 = vpow.pop %v1723
  %v1725 = vmul.f32 %v1696, 1.442695
  %v1726 = vpow.pop %v1725
  %v1727 = vmul.f32 %v1697, 1.442695
  %v1728 = vpow.pop %v1727
  %v1729 = vmul.f32 %v1698, 1.442695
  %v1730 = vpow.pop %v1729
  %v1731 = vadd.f32 %v1700, %v1704
  %v1732 = vadd.f32 %v1731, %v1708
  %v1733 = vadd.f32 %v1732, %v1712
  %v1734 = vadd.f32 %v1733, %v1716
  %v1735 = vadd.f32 %v1734, %v1720
  %v1736 = vadd.f32 %v1735, %v1724
  %v1737 = vadd.f32 %v1736, %v1728
  %v1738 = vrot.slane %v1737, 4
  %v1739 = vadd.f32 %v1737, %v1738
  %v1740 = vrot.slane %v1739, 2
  %v1741 = vadd.f32 %v1739, %v1740
  %v1742 = vrot.slane %v1741, 1
  %v1743 = vadd.f32 %v1741, %v1742
  %v1744 = vadd.f32 %v1702, %v1706
  %v1745 = vadd.f32 %v1744, %v1710
  %v1746 = vadd.f32 %v1745, %v1714
  %v1747 = vadd.f32 %v1746, %v1718
  %v1748 = vadd.f32 %v1747, %v1722
  %v1749 = vadd.f32 %v1748, %v1726
  %v1750 = vadd.f32 %v1749, %v1730
  %v1751 = vrot.slane %v1750, 4
  %v1752 = vadd.f32 %v1750, %v1751
  %v1753 = vrot.slane %v1752, 2
  %v1754 = vadd.f32 %v1752, %v1753
  %v1755 = vrot.slane %v1754, 1
  %v1756 = vadd.f32 %v1754, %v1755
  %1765 = vrot.lane.b32.xlu0 %v1556, 96
  %v1766 = vpop.permute.xlu0 %1765
  %1767 = vrot.lane.b32.xlu0 %v1557, 96
  %v1768 = vpop.permute.xlu0 %1767
  %1769 = vrot.lane.b32.xlu0 %v1558, 96
  %v1770 = vpop.permute.xlu0 %1769
  %1771 = vrot.lane.b32.xlu0 %v1559, 96
  %v1772 = vpop.permute.xlu0 %1771
  %1773 = vrot.lane.b32.xlu0 %v1560, 96
  %v1774 = vpop.permute.xlu0 %1773
  %1775 = vrot.lane.b32.xlu0 %v1561, 96
  %v1776 = vpop.permute.xlu0 %1775
  %1777 = vrot.lane.b32.xlu0 %v1562, 96
  %v1778 = vpop.permute.xlu0 %1777
  %1779 = vrot.lane.b32.xlu0 %v1563, 96
  %v1780 = vpop.permute.xlu0 %1779
  %1789 = vxpose.xlu0.b32.start [1/16] %v1766, 128
  %1790 = vxpose.xlu0.b32.cont [2/16] %v1768, 128
  %1791 = vxpose.xlu0.b32.cont [3/16] %v1770, 128
  %1792 = vxpose.xlu0.b32.cont [4/16] %v1772, 128
  %1793 = vxpose.xlu0.b32.cont [5/16] %v1774, 128
  %1794 = vxpose.xlu0.b32.cont [6/16] %v1776, 128
  %1795 = vxpose.xlu0.b32.cont [7/16] %v1778, 128
  %1796 = vxpose.xlu0.b32.cont [8/16] %v1780, 128
  %1797 = vxpose.xlu0.b32.cont [9/16] 0.0, 128
  %1798 = vxpose.xlu0.b32.cont [10/16] 0.0, 128
  %1799 = vxpose.xlu0.b32.cont [11/16] 0.0, 128
  %1800 = vxpose.xlu0.b32.cont [12/16] 0.0, 128
  %1801 = vxpose.xlu0.b32.cont [13/16] 0.0, 128
  %1802 = vxpose.xlu0.b32.cont [14/16] 0.0, 128
  %1803 = vxpose.xlu0.b32.cont [15/16] 0.0, 128
  %1804 = vxpose.xlu0.b32.end [16/16] 0.0, 128
  %v1805 = vpop.trf.xlu0
  %v1806 = vpop.trf.xlu0
  %v1807 = vpop.trf.xlu0
  %v1808 = vpop.trf.xlu0
  %v1809 = vpop.trf.xlu0
  %v1810 = vpop.trf.xlu0
  %v1811 = vpop.trf.xlu0
  %v1812 = vpop.trf.xlu0
  %v1813 = vpop.trf.xlu0
  %v1814 = vpop.trf.xlu0
  %v1815 = vpop.trf.xlu0
  %v1816 = vpop.trf.xlu0
  %v1817 = vpop.trf.xlu0
  %v1818 = vpop.trf.xlu0
  %v1819 = vpop.trf.xlu0
  %v1820 = vpop.trf.xlu0
  %v1821 = vpack.c.bf16 %v1806, %v1805
  %v1822 = vpack.c.bf16 %v1808, %v1807
  %v1823 = vpack.c.bf16 %v1704, %v1700
  %v1824 = vpack.c.bf16 %v1706, %v1702
  %v1825 = vpack.c.bf16 %v1712, %v1708
  %v1826 = vpack.c.bf16 %v1714, %v1710
  %v1827 = vpack.c.bf16 %v1720, %v1716
  %v1828 = vpack.c.bf16 %v1722, %v1718
  %v1829 = vpack.c.bf16 %v1728, %v1724
  %v1830 = vpack.c.bf16 %v1730, %v1726
  %v1832 = vsel %vm146, %v1821, 0
  %v1835 = vsel %vm146, %v1822, 0
  %1837 = vmatprep.subr.bf16.mxu0 %v1824
  %1838 = vmatpush1.bf16.msra.mxu0 %v1823
  %1839 = vmatprep.subr.bf16.mxu0 %v1826
  %1840 = vmatpush1.bf16.msra.mxu0 %v1825
  %1841 = vmatprep.subr.bf16.mxu0 %v1828
  %1842 = vmatpush1.bf16.msra.mxu0 %v1827
  %1843 = vmatprep.subr.bf16.mxu0 %v1830
  %1844 = vmatpush1.bf16.msra.mxu0 %v1829
  %1845 = vmatprep.subr.bf16.mxu0 0
  %1846 = vmatpush1.bf16.msra.mxu0 0
  %1847 = vmatprep.subr.bf16.mxu0 0
  %1848 = vmatpush1.bf16.msra.mxu0 0
  %1849 = vmatprep.subr.bf16.mxu0 0
  %1850 = vmatpush1.bf16.msra.mxu0 0
  %1851 = vmatprep.subr.bf16.mxu0 0
  %1852 = vmatpush1.bf16.msra.mxu0 0
  %1853 = vmatprep.subr.bf16.mxu0 0
  %1854 = vmatpush1.bf16.msra.mxu0 0
  %1855 = vmatprep.subr.bf16.mxu0 0
  %1856 = vmatpush1.bf16.msra.mxu0 0
  %1857 = vmatprep.subr.bf16.mxu0 0
  %1858 = vmatpush1.bf16.msra.mxu0 0
  %1859 = vmatprep.subr.bf16.mxu0 0
  %1860 = vmatpush1.bf16.msra.mxu0 0
  %1861 = vmatprep.subr.bf16.mxu0 0
  %1862 = vmatpush1.bf16.msra.mxu0 0
  %1863 = vmatprep.subr.bf16.mxu0 0
  %1864 = vmatpush1.bf16.msra.mxu0 0
  %1865 = vmatprep.subr.bf16.mxu0 0
  %1866 = vmatpush1.bf16.msra.mxu0 0
  %1867 = vmatprep.subr.bf16.mxu0 0
  %1868 = vmatpush1.bf16.msra.mxu0 0
  %1869 = vmatprep.mubr.bf16.mxu0 0
  %1870 = vmatmul.mubr.bf16.gmra.mrb[0].mxu0 %v1832
  %v1871 = vpop.f32.mrb[0].mxu0
  %v1872 = vadd.f32 0.0, %v1871
  %v1873 = vpop.f32.mrb[0].mxu0
  %v1874 = vadd.f32 0.0, %v1873
  %v1875 = vpop.f32.mrb[0].mxu0
  %v1876 = vadd.f32 0.0, %v1875
  %v1877 = vpop.f32.mrb[0].mxu0
  %v1878 = vadd.f32 0.0, %v1877
  %1879 = vmatprep.mubr.bf16.mxu0 0
  %1880 = vmatmul.mubr.bf16.gmra.mrb[0].mxu0 %v1835
  %v1881 = vpop.f32.mrb[0].mxu0
  %v1882 = vadd.f32 0.0, %v1881
  %v1883 = vpop.f32.mrb[0].mxu0
  %v1884 = vadd.f32 0.0, %v1883
  %v1885 = vpop.f32.mrb[0].mxu0
  %v1886 = vadd.f32 0.0, %v1885
  %v1887 = vpop.f32.mrb[0].mxu0
  %v1888 = vadd.f32 0.0, %v1887
  %1889 = vdwg.mxu0
  %v1890 = vrcp.pop %v1743
  %v1891 = vrcp.pop %v1756
  %v1892 = vmul.f32 %v1872, %v1890
  %v1893 = vmul.f32 %v1874, %v1891
  %v1894 = vmul.f32 %v1876, %v1890
  %v1895 = vmul.f32 %v1878, %v1891
  %v1896 = vmul.f32 %v1882, %v1890
  %v1897 = vmul.f32 %v1884, %v1891
  %v1898 = vmul.f32 %v1886, %v1890
  %v1899 = vmul.f32 %v1888, %v1891
  %v1900 = vpack.c.bf16 %v1894, %v1892
  %v1901 = vpack.c.bf16 %v1895, %v1893
  %v1902 = vpack.c.bf16 %v1898, %v1896
  %v1903 = vpack.c.bf16 %v1899, %v1897
  %1904 = vmatprep.subr.bf16.mxu0 %v1901
  %1905 = vmatpush1.bf16.msra.mxu0 %v1900
  %1906 = vmatprep.subr.bf16.mxu0 %v1903
  %1907 = vmatpush1.bf16.msra.mxu0 %v1902
  %1908 = vmatprep.subr.bf16.mxu0 0
  %1909 = vmatpush1.bf16.msra.mxu0 0
  %1910 = vmatprep.subr.bf16.mxu0 0
  %1911 = vmatpush1.bf16.msra.mxu0 0
  %1912 = vmatprep.subr.bf16.mxu0 0
  %1913 = vmatpush1.bf16.msra.mxu0 0
  %1914 = vmatprep.subr.bf16.mxu0 0
  %1915 = vmatpush1.bf16.msra.mxu0 0
  %1916 = vmatprep.subr.bf16.mxu0 0
  %1917 = vmatpush1.bf16.msra.mxu0 0
  %1918 = vmatprep.subr.bf16.mxu0 0
  %1919 = vmatpush1.bf16.msra.mxu0 0
  %1920 = vmatprep.subr.bf16.mxu0 0
  %1921 = vmatpush1.bf16.msra.mxu0 0
  %1922 = vmatprep.subr.bf16.mxu0 0
  %1923 = vmatpush1.bf16.msra.mxu0 0
  %1924 = vmatprep.subr.bf16.mxu0 0
  %1925 = vmatpush1.bf16.msra.mxu0 0
  %1926 = vmatprep.subr.bf16.mxu0 0
  %1927 = vmatpush1.bf16.msra.mxu0 0
  %1928 = vmatprep.subr.bf16.mxu0 0
  %1929 = vmatpush1.bf16.msra.mxu0 0
  %1930 = vmatprep.subr.bf16.mxu0 0
  %1931 = vmatpush1.bf16.msra.mxu0 0
  %1932 = vmatprep.subr.bf16.mxu0 0
  %1933 = vmatpush1.bf16.msra.mxu0 0
  %1934 = vmatprep.subr.bf16.mxu0 0
  %1935 = vmatpush1.bf16.msra.mxu0 0
  %1936 = vmatprep.mubr.bf16.mxu0 0
  %1937 = vmatmul.mubr.bf16.gmra.mrb[0].mxu0 %v1089
  %v1938 = vpop.f32.mrb[0].mxu0
  %v1939 = vadd.f32 %v1031, %v1938
  %v1940 = vpop.f32.mrb[0].mxu0
  %v1941 = vadd.f32 %v1031, %v1940
  %v1942 = vpop.f32.mrb[0].mxu0
  %v1943 = vadd.f32 %v1036, %v1942
  %v1944 = vpop.f32.mrb[0].mxu0
  %v1945 = vadd.f32 %v1036, %v1944
  %1946 = vmatprep.mubr.bf16.mxu0 0
  %1947 = vmatmul.mubr.bf16.gmra.mrb[0].mxu0 %v1092
  %v1948 = vpop.f32.mrb[0].mxu0
  %v1949 = vadd.f32 %v1041, %v1948
  %v1950 = vpop.f32.mrb[0].mxu0
  %v1951 = vadd.f32 %v1041, %v1950
  %v1952 = vpop.f32.mrb[0].mxu0
  %v1953 = vadd.f32 %v1046, %v1952
  %v1954 = vpop.f32.mrb[0].mxu0
  %v1955 = vadd.f32 %v1046, %v1954
  %1956 = vmatprep.mubr.bf16.mxu0 0
  %1957 = vmatmul.mubr.bf16.gmra.mrb[0].mxu0 %v1095
  %v1958 = vpop.f32.mrb[0].mxu0
  %v1959 = vadd.f32 %v1051, %v1958
  %v1960 = vpop.f32.mrb[0].mxu0
  %v1961 = vadd.f32 %v1051, %v1960
  %v1962 = vpop.f32.mrb[0].mxu0
  %v1963 = vadd.f32 %v1056, %v1962
  %v1964 = vpop.f32.mrb[0].mxu0
  %v1965 = vadd.f32 %v1056, %v1964
  %1966 = vmatprep.mubr.bf16.mxu0 0
  %1967 = vmatmul.mubr.bf16.gmra.mrb[0].mxu0 %v1098
  %v1968 = vpop.f32.mrb[0].mxu0
  %v1969 = vadd.f32 %v1061, %v1968
  %v1970 = vpop.f32.mrb[0].mxu0
  %v1971 = vadd.f32 %v1061, %v1970
  %v1972 = vpop.f32.mrb[0].mxu0
  %v1973 = vadd.f32 %v1066, %v1972
  %v1974 = vpop.f32.mrb[0].mxu0
  %v1975 = vadd.f32 %v1066, %v1974
  %1976 = vdwg.mxu0
  %v1977 = vadd.f32 %v1939, %v1206
  %v1978 = vadd.f32 %v1941, %v1207
  %v1979 = vadd.f32 %v1943, %v1208
  %v1980 = vadd.f32 %v1945, %v1209
  %v1981 = vadd.f32 %v1949, %v1210
  %v1982 = vadd.f32 %v1951, %v1211
  %v1983 = vadd.f32 %v1953, %v1212
  %v1984 = vadd.f32 %v1955, %v1213
  %v1985 = vadd.f32 %v1959, %v1214
  %v1986 = vadd.f32 %v1961, %v1215
  %v1987 = vadd.f32 %v1963, %v1216
  %v1988 = vadd.f32 %v1965, %v1217
  %v1989 = vadd.f32 %v1969, %v1218
  %v1990 = vadd.f32 %v1971, %v1219
  %v1991 = vadd.f32 %v1973, %v1220
  %v1992 = vadd.f32 %v1975, %v1221
  %s1993 = scalar_lea.vmem %s7, 128
  %1994 = vst [vmem:[%s1993] sm:$0xff] %v1977
  %1995 = vst [vmem:[%s1993 + $0x8] sm:$0xff] %v1978
  %1996 = vst [vmem:[%s1993 + $0x10] sm:$0xff] %v1979
  %1997 = vst [vmem:[%s1993 + $0x18] sm:$0xff] %v1980
  %1998 = vst [vmem:[%s1993 + $0x20] sm:$0xff] %v1981
  %1999 = vst [vmem:[%s1993 + $0x28] sm:$0xff] %v1982
  %2000 = vst [vmem:[%s1993 + $0x30] sm:$0xff] %v1983
  %2001 = vst [vmem:[%s1993 + $0x38] sm:$0xff] %v1984
  %2002 = vst [vmem:[%s1993 + $0x40] sm:$0xff] %v1985
  %2003 = vst [vmem:[%s1993 + $0x48] sm:$0xff] %v1986
  %2004 = vst [vmem:[%s1993 + $0x50] sm:$0xff] %v1987
  %2005 = vst [vmem:[%s1993 + $0x58] sm:$0xff] %v1988
  %2006 = vst [vmem:[%s1993 + $0x60] sm:$0xff] %v1989
  %2007 = vst [vmem:[%s1993 + $0x68] sm:$0xff] %v1990
  %2008 = vst [vmem:[%s1993 + $0x70] sm:$0xff] %v1991
  %2009 = vst [vmem:[%s1993 + $0x78] sm:$0xff] %v1992
  // Predicated region
  $region30: #{nonlocal_forward.1} parent=0 // pred_check
    _
  $region31: #{nonlocal_forward.1} parent=0 // pred_check_branch
    %2011 = sbr.rel (0) target = $region33
  $region32: #{nonlocal_forward.1} parent=0 // pred_region
    _
  $region33: #{nonlocal_forward.1} parent=0 // pred_fallthru
    _
  // Predicated region
  $region34: #{nonlocal_forward.1} parent=0 // pred_check
    _
  $region35: #{nonlocal_forward.1} parent=0 // pred_check_branch
    %2013 = sbr.rel (0) target = $region37
  $region36: #{nonlocal_forward.1} parent=0 // pred_region
    _
  $region37: #{nonlocal_forward.1} parent=0 // pred_fallthru
    _

</llo_original>
